<compile_context>
chip_gen: v7x
topology: tpu7x:2x2x1
jax: 0.10.0
libtpu: 0.0.40
codegen_flags: <defaults>
</compile_context>

<pallas_src>
import jax
import jax.numpy as jnp
from jax.experimental import pallas as pl
from jax.experimental.pallas import tpu as pltpu


# ---- packed-parameter slab layout (rows; all offsets are sublane-aligned) ----
LANES = 128          # padded width of every layer (hidden 24 -> 128)
OUT_LANES = 8        # narrow HBM output width (3 real q-values, zero-padded to 8)
W1_OFF = 0           # [8, 128]   rows   0..7    (valid cols 0..23)
B1_OFF = 8           # [1, 128]   row    8       (valid cols 0..23)
W2_OFF = 16          # [128, 128] rows  16..143  (valid rows 16..39, cols 0..23)
B2_OFF = 144         # [1, 128]   row  144       (valid cols 0..23)
W3_OFF = 152         # [128, 128] rows 152..279  (valid rows 152..175, cols 0..2)
B3_OFF = 280         # [1, 128]   row  280       (valid cols 0..2)
SLAB_ROWS = 288

TILE_B_MAX = 2048     # large-batch tile: ~3 MiB of VMEM incl. intermediates
SINGLE_TILE_MAX = 256 # batches up to this size run as one grid step


def _round_up(n, m):
    return ((n + m - 1) // m) * m


def dqn_forward_kernel(x_ref, p_ref, out_ref):
    """One batch tile: fused 3-layer MLP, all operands already in VMEM."""
    x = x_ref[...]                                   # [tile_b, 8] f32

    w1 = p_ref[W1_OFF:W1_OFF + 8, :]                 # [8, 128]
    b1 = p_ref[B1_OFF:B1_OFF + 1, :]                 # [1, 128]
    w2 = p_ref[W2_OFF:W2_OFF + LANES, :]             # [128, 128]
    b2 = p_ref[B2_OFF:B2_OFF + 1, :]                 # [1, 128]
    w3 = p_ref[W3_OFF:W3_OFF + LANES, :]             # [128, 128]
    b3 = p_ref[B3_OFF:B3_OFF + 1, :]                 # [1, 128]

    hi = jax.lax.Precision.HIGHEST
    h1 = jnp.dot(x, w1, preferred_element_type=jnp.float32, precision=hi) + b1
    h1 = jnp.maximum(h1, 0.0)                        # [tile_b, 128] (cols 24.. stay 0)
    h2 = jnp.dot(h1, w2, preferred_element_type=jnp.float32, precision=hi) + b2
    h2 = jnp.maximum(h2, 0.0)                        # [tile_b, 128] (cols 24.. stay 0)
    out = jnp.dot(h2, w3, preferred_element_type=jnp.float32, precision=hi) + b3
    out_ref[...] = out[:, :OUT_LANES]                # narrow store: only 8 lanes hit HBM


def pack_params(params):
    """Zero-pad and pack (w1,b1,w2,b2,w3,b3) into one [288, 128] f32 slab.

    Call ONCE per parameter update and reuse the slab across forward calls.
    """
    w1, b1, w2, b2, w3, b3 = params
    slab = jnp.zeros((SLAB_ROWS, LANES), jnp.float32)
    slab = slab.at[W1_OFF:W1_OFF + 8, 0:24].set(w1.astype(jnp.float32))
    slab = slab.at[B1_OFF, 0:24].set(b1.reshape(-1).astype(jnp.float32))
    slab = slab.at[W2_OFF:W2_OFF + 24, 0:24].set(w2.astype(jnp.float32))
    slab = slab.at[B2_OFF, 0:24].set(b2.reshape(-1).astype(jnp.float32))
    slab = slab.at[W3_OFF:W3_OFF + 24, 0:3].set(w3.astype(jnp.float32))
    slab = slab.at[B3_OFF, 0:3].set(b3.reshape(-1).astype(jnp.float32))
    return slab


def dqn_forward(x, slab):
    """DQNAgent forward pass with a batch-tiled Pallas kernel (jit-friendly)."""
    B = x.shape[0]

    # --- pick the batch tile (all decisions are static under jit) ---
    b_pad = _round_up(max(B, 8), 8)
    if b_pad <= SINGLE_TILE_MAX:
        tile_b = b_pad                                  # single grid step
    else:
        # >= 2 grid steps so both v7x TensorCores get work; cap at TILE_B_MAX.
        tile_b = min(TILE_B_MAX, _round_up(-(-b_pad // 2), 8))
        b_pad = _round_up(b_pad, tile_b)
    grid = (b_pad // tile_b,)

    # --- fast path: skip the pad/copy when the batch is already aligned f32 ---
    if b_pad == B and x.dtype == jnp.float32:
        x_pad = x
    else:
        x_pad = jnp.zeros((b_pad, 8), jnp.float32).at[:B, :].set(
            x.astype(jnp.float32))

    out_pad = pl.pallas_call(
        dqn_forward_kernel,
        out_shape=jax.ShapeDtypeStruct((b_pad, OUT_LANES), jnp.float32),
        grid=grid,
        in_specs=[
            pl.BlockSpec((tile_b, 8), lambda i: (i, 0)),            # x: tiled over batch
            pl.BlockSpec((SLAB_ROWS, LANES), lambda i: (0, 0)),     # weights: resident
        ],
        out_specs=pl.BlockSpec((tile_b, OUT_LANES), lambda i: (i, 0)),  # narrow output
        compiler_params=pltpu.CompilerParams(
            dimension_semantics=("parallel",),
        ),
    )(x_pad, slab)

    return out_pad[:B, :3]


def init_params(key):
    """Deterministic init mimicking nn.Linear default: U(-1/sqrt(fan_in), +1/sqrt(fan_in))."""
    dims = [(8, 24), (24, 24), (24, 3)]
    params = []
    for i, (fan_in, fan_out) in enumerate(dims):
        kw, kb = jax.random.split(jax.random.fold_in(key, i))
        bound = 1.0 / jnp.sqrt(jnp.float32(fan_in))
        w = jax.random.uniform(kw, (fan_in, fan_out), jnp.float32, -bound, bound)
        b = jax.random.uniform(kb, (1, fan_out), jnp.float32, -bound, bound)
        params.extend([w, b])
    return tuple(params)


def reference_forward(x, params):
    w1, b1, w2, b2, w3, b3 = params
    h1 = jnp.maximum(x @ w1 + b1, 0.0)
    h2 = jnp.maximum(h1 @ w2 + b2, 0.0)
    return h2 @ w3 + b3


if __name__ == "__main__":
    key = jax.random.PRNGKey(0)
    k_params, k_x = jax.random.split(key)

    params = init_params(k_params)
    # Pack the parameter slab ONCE; reuse it for every forward call.
    slab = jax.block_until_ready(pack_params(params))
    fwd = jax.jit(dqn_forward)

    # Small batch (single tile).
    x = jax.random.normal(k_x, (4, 8), jnp.float32)   # batch=4, state_dim=8
    out = jax.block_until_ready(fwd(x, slab))
    ref = reference_forward(x, params)
    assert out.shape == (4, 3), out.shape
    assert jnp.allclose(out, ref, atol=1e-5, rtol=1e-5), "mismatch vs reference"

    # Non-aligned mid batch: exercises padding + the 2-step grid path.
    x_mid = jax.random.normal(jax.random.fold_in(k_x, 1), (300, 8), jnp.float32)
    out_mid = jax.block_until_ready(fwd(x_mid, slab))
    ref_mid = reference_forward(x_mid, params)
    assert out_mid.shape == (300, 3), out_mid.shape
    assert jnp.allclose(out_mid, ref_mid, atol=1e-5, rtol=1e-5), "mismatch (mid batch)"

    # Aligned batch: exercises the no-copy fast path + 2-step grid.
    x_big = jax.random.normal(jax.random.fold_in(k_x, 2), (512, 8), jnp.float32)
    out_big = jax.block_until_ready(fwd(x_big, slab))
    ref_big = reference_forward(x_big, params)
    assert out_big.shape == (512, 3), out_big.shape
    assert jnp.allclose(out_big, ref_big, atol=1e-5, rtol=1e-5), "mismatch (big batch)"

    print("KERNEL_OK")
</pallas_src>

<mosaic_0001>
module attributes {stable_mosaic.version = 11 : i64} {
  func.func @dqn_forward_kernel(%arg0: i32, %arg1: memref<8x8xf32, #tpu.memory_space<vmem>>, %arg2: memref<288x128xf32, #tpu.memory_space<vmem>>, %arg3: memref<8x8xf32, #tpu.memory_space<vmem>>) attributes {dimension_semantics = [#tpu.dimension_semantics<parallel>], iteration_bounds = array<i64: 1>, scalar_prefetch = 0 : i64, scratch_operands = 0 : i64, tpu.core_type = #tpu.core_type<tc>, window_params = [{transform_indices = @transform_0, window_bounds = array<i64: 8, 8>}, {pipeline_mode = #tpu.pipeline_mode<synchronous>, transform_indices = @transform_1, window_bounds = array<i64: 288, 128>}, {transform_indices = @transform_2, window_bounds = array<i64: 8, 8>}]} {
    %c0 = arith.constant 0 : index
    %c0_0 = arith.constant 0 : index
    %0 = vector.load %arg1[%c0, %c0_0] : memref<8x8xf32, #tpu.memory_space<vmem>>, vector<8x8xf32>
    %c0_1 = arith.constant 0 : index
    %c0_2 = arith.constant 0 : index
    %1 = vector.load %arg2[%c0_1, %c0_2] : memref<288x128xf32, #tpu.memory_space<vmem>>, vector<8x128xf32>
    %c8 = arith.constant 8 : index
    %c0_3 = arith.constant 0 : index
    %2 = vector.load %arg2[%c8, %c0_3] : memref<288x128xf32, #tpu.memory_space<vmem>>, vector<1x128xf32>
    %c16 = arith.constant 16 : index
    %c0_4 = arith.constant 0 : index
    %3 = vector.load %arg2[%c16, %c0_4] : memref<288x128xf32, #tpu.memory_space<vmem>>, vector<128x128xf32>
    %c144 = arith.constant 144 : index
    %c0_5 = arith.constant 0 : index
    %4 = vector.load %arg2[%c144, %c0_5] : memref<288x128xf32, #tpu.memory_space<vmem>>, vector<1x128xf32>
    %c152 = arith.constant 152 : index
    %c0_6 = arith.constant 0 : index
    %5 = vector.load %arg2[%c152, %c0_6] : memref<288x128xf32, #tpu.memory_space<vmem>>, vector<128x128xf32>
    %c280 = arith.constant 280 : index
    %c0_7 = arith.constant 0 : index
    %6 = vector.load %arg2[%c280, %c0_7] : memref<288x128xf32, #tpu.memory_space<vmem>>, vector<1x128xf32>
    %cst = arith.constant dense<0.000000e+00> : vector<8x128xf32>
    %7 = tpu.matmul %0, %1, %cst {dimension_numbers = #tpu.dot_dimension_numbers<[1], [0], [0], [1], [0, 0, 1, 1], [], []>, precision = #tpu.contract_precision<fp32>} : vector<8x8xf32>, vector<8x128xf32>, vector<8x128xf32> -> vector<8x128xf32>
    %8 = vector.broadcast %2 : vector<1x128xf32> to vector<8x128xf32>
    %9 = arith.addf %7, %8 : vector<8x128xf32>
    %cst_8 = arith.constant 0.000000e+00 : f32
    %10 = vector.broadcast %cst_8 : f32 to vector<8x128xf32>
    %11 = arith.maximumf %9, %10 : vector<8x128xf32>
    %cst_9 = arith.constant dense<0.000000e+00> : vector<8x128xf32>
    %12 = tpu.matmul %11, %3, %cst_9 {dimension_numbers = #tpu.dot_dimension_numbers<[1], [0], [0], [1], [0, 0, 1, 1], [], []>, precision = #tpu.contract_precision<fp32>} : vector<8x128xf32>, vector<128x128xf32>, vector<8x128xf32> -> vector<8x128xf32>
    %13 = vector.broadcast %4 : vector<1x128xf32> to vector<8x128xf32>
    %14 = arith.addf %12, %13 : vector<8x128xf32>
    %cst_10 = arith.constant 0.000000e+00 : f32
    %15 = vector.broadcast %cst_10 : f32 to vector<8x128xf32>
    %16 = arith.maximumf %14, %15 : vector<8x128xf32>
    %cst_11 = arith.constant dense<0.000000e+00> : vector<8x128xf32>
    %17 = tpu.matmul %16, %5, %cst_11 {dimension_numbers = #tpu.dot_dimension_numbers<[1], [0], [0], [1], [0, 0, 1, 1], [], []>, precision = #tpu.contract_precision<fp32>} : vector<8x128xf32>, vector<128x128xf32>, vector<8x128xf32> -> vector<8x128xf32>
    %18 = vector.broadcast %6 : vector<1x128xf32> to vector<8x128xf32>
    %19 = arith.addf %17, %18 : vector<8x128xf32>
    %20 = vector.extract_strided_slice %19 {offsets = [0, 0], sizes = [8, 8], strides = [1, 1]} : vector<8x128xf32> to vector<8x8xf32>
    %c0_12 = arith.constant 0 : index
    %c0_13 = arith.constant 0 : index
    %21 = vector.load %arg3[%c0_12, %c0_13] : memref<8x8xf32, #tpu.memory_space<vmem>>, vector<8x8xf32>
    tpu.vector_store %arg3[%c0_12, %c0_13], %20 {strides = array<i32>} : memref<8x8xf32, #tpu.memory_space<vmem>>, vector<8x8xf32>,
    return
  }
  func.func @transform_0(%arg0: i32) -> (i32, i32) {
    %c0_i32 = arith.constant 0 : i32
    %c0_i32_0 = arith.constant 0 : i32
    return %arg0, %c0_i32 : i32, i32
  }
  func.func @transform_1(%arg0: i32) -> (i32, i32) {
    %c0_i32 = arith.constant 0 : i32
    %c0_i32_0 = arith.constant 0 : i32
    %c0_i32_1 = arith.constant 0 : i32
    return %c0_i32, %c0_i32_0 : i32, i32
  }
  func.func @transform_2(%arg0: i32) -> (i32, i32) {
    %c0_i32 = arith.constant 0 : i32
    %c0_i32_0 = arith.constant 0 : i32
    return %arg0, %c0_i32 : i32, i32
  }
}

</mosaic_0001>

<llo_original>
// kernel: dqn_forward.1
$region0: #{dqn_forward.1}
  #allocation0 [shape = 'u32[]', space=smem, size = 0x4, offset = 0x4, fixed_abs, tag = 'smem constant byte address 0x4 - core index']
  #allocation1 [shape = 'u32[144,128]{1,0:T(1,128)}', space=vmem, size = 0x12000, scoped, tag = 'internal scratch']
  %s0 = inlined_call_operand.vmem [shape: f32[8,8], index: 0, kind: input, shape index: {}]
  %s1 = inlined_call_operand.hbm [shape: f32[288,128], index: 1, kind: input, shape index: {}]
  %s2 = inlined_call_operand.vmem [shape: f32[8,8], index: 2, kind: output, shape index: {}]
  %s3 = sld [smem:[#allocation0]]
  $region22: #{dqn_forward.1} parent=0
    _
  %s5 = ssub.s32 1, %s3
  %s6 = scalar_select 0, %s5, %s3
  $region1: #{dqn_forward.1} parent=0
    #allocation2 [shape = 'u8[147456]{0}', space=vmem, size = 0x24000, scoped, tag = 'input window, operand 1, single buffered']
    #allocation3 [shape = 's32[1]{0}', space=sflag, size = 0x4, scoped, tag = 'scoped memory for dqn_forward.1']
    %7 = vsyncpa [#allocation3], 0
    // Predicated region
    $region2: #{dqn_forward.1} parent=1 // pred_check
      _
    $region3: #{dqn_forward.1} parent=1 // pred_check_branch
      %9 = sbr.rel (0) target = $region5
    $region4: #{dqn_forward.1} parent=1 // pred_region
      _
    $region5: #{dqn_forward.1} parent=1 // pred_fallthru
      _
    // Predicated region
    $region6: #{dqn_forward.1} parent=1 // pred_check
      _
    $region7: #{dqn_forward.1} parent=1 // pred_check_branch
      %11 = sbr.rel (0) target = $region9
    $region8: #{dqn_forward.1} parent=1 // pred_region
      %s13 = ssub.s32 4608, 4608
      %14 = vsyncadd [#allocation3], %s13
      %s15 = sshll.u32 [#allocation2], 4
      %s16 = int_to_ptr.vmem [resolvable:$true] %s15
      %21 = dma.hbm_to_vmem [thread:$0]  %s1, 4608, %s16, [#allocation3], 128, 128, 8
    $region9: #{dqn_forward.1} parent=1 // pred_fallthru
      _
    // Predicated region
    $region10: #{dqn_forward.1} parent=1 // pred_check
      _
    $region11: #{dqn_forward.1} parent=1 // pred_check_branch
      %23 = sbr.rel (0) target = $region13
    $region12: #{dqn_forward.1} parent=1 // pred_region
      %24 = dma.done [#allocation3], 4608
    $region13: #{dqn_forward.1} parent=1 // pred_fallthru
      _
    %v25 = vld [vmem:[%s0] sm:$0xff]
    %v26 = vld [vmem:[#allocation2] sm:$0xff]
    %v27 = vld [vmem:[#allocation2 + $0x8] sm:$0x1]
    %v28 = vld [vmem:[#allocation2 + $0x10] sm:$0xff]
    %v29 = vld [vmem:[#allocation2 + $0x18] sm:$0xff]
    %v30 = vld [vmem:[#allocation2 + $0x20] sm:$0xff]
    %v31 = vld [vmem:[#allocation2 + $0x28] sm:$0xff]
    %v32 = vld [vmem:[#allocation2 + $0x30] sm:$0xff]
    %v33 = vld [vmem:[#allocation2 + $0x38] sm:$0xff]
    %v34 = vld [vmem:[#allocation2 + $0x40] sm:$0xff]
    %v35 = vld [vmem:[#allocation2 + $0x48] sm:$0xff]
    %v36 = vld [vmem:[#allocation2 + $0x50] sm:$0xff]
    %v37 = vld [vmem:[#allocation2 + $0x58] sm:$0xff]
    %v38 = vld [vmem:[#allocation2 + $0x60] sm:$0xff]
    %v39 = vld [vmem:[#allocation2 + $0x68] sm:$0xff]
    %v40 = vld [vmem:[#allocation2 + $0x70] sm:$0xff]
    %v41 = vld [vmem:[#allocation2 + $0x78] sm:$0xff]
    %v42 = vld [vmem:[#allocation2 + $0x80] sm:$0xff]
    %v43 = vld [vmem:[#allocation2 + $0x88] sm:$0xff]
    %v44 = vld [vmem:[#allocation2 + $0x90] sm:$0x1]
    %v45 = vld [vmem:[#allocation2 + $0x98] sm:$0xff]
    %v46 = vld [vmem:[#allocation2 + $0xa0] sm:$0xff]
    %v47 = vld [vmem:[#allocation2 + $0xa8] sm:$0xff]
    %v48 = vld [vmem:[#allocation2 + $0xb0] sm:$0xff]
    %v49 = vld [vmem:[#allocation2 + $0xb8] sm:$0xff]
    %v50 = vld [vmem:[#allocation2 + $0xc0] sm:$0xff]
    %v51 = vld [vmem:[#allocation2 + $0xc8] sm:$0xff]
    %v52 = vld [vmem:[#allocation2 + $0xd0] sm:$0xff]
    %v53 = vld [vmem:[#allocation2 + $0xd8] sm:$0xff]
    %v54 = vld [vmem:[#allocation2 + $0xe0] sm:$0xff]
    %v55 = vld [vmem:[#allocation2 + $0xe8] sm:$0xff]
    %v56 = vld [vmem:[#allocation2 + $0xf0] sm:$0xff]
    %v57 = vld [vmem:[#allocation2 + $0xf8] sm:$0xff]
    %v58 = vld [vmem:[#allocation2 + $0x100] sm:$0xff]
    %v59 = vld [vmem:[#allocation2 + $0x108] sm:$0xff]
    %v60 = vld [vmem:[#allocation2 + $0x110] sm:$0xff]
    %v61 = vld [vmem:[#allocation2 + $0x118] sm:$0x1]
    %v62 = vlaneseq
    %v63 = vshrl.u32 %v62, 7
    %v64 = vsub.s32 0, %v63
    %v65 = vrot.slane %v27, %v64
    %vm66 = vcmask 64512
    %v68 = vsel %vm66, %v25, 0
    %70 = vmatprep.subr.mxu0 0.0
    %v71 = vand.u32 %v26, 4294901760
    %72 = vmatpush1.msra.mxu0 %v71
    %73 = vmatprep.subr.mxu0 0.0
    %74 = vmatpush1.msra.mxu0 0.0
    %75 = vmatprep.subr.mxu0 0.0
    %76 = vmatpush1.msra.mxu0 0.0
    %77 = vmatprep.subr.mxu0 0.0
    %78 = vmatpush1.msra.mxu0 0.0
    %79 = vmatprep.subr.mxu0 0.0
    %80 = vmatpush1.msra.mxu0 0.0
    %81 = vmatprep.subr.mxu0 0.0
    %82 = vmatpush1.msra.mxu0 0.0
    %83 = vmatprep.subr.mxu0 0.0
    %84 = vmatpush1.msra.mxu0 0.0
    %85 = vmatprep.subr.mxu0 0.0
    %86 = vmatpush1.msra.mxu0 0.0
    %87 = vmatprep.subr.mxu0 0.0
    %88 = vmatpush1.msra.mxu0 0.0
    %89 = vmatprep.subr.mxu0 0.0
    %90 = vmatpush1.msra.mxu0 0.0
    %91 = vmatprep.subr.mxu0 0.0
    %92 = vmatpush1.msra.mxu0 0.0
    %93 = vmatprep.subr.mxu0 0.0
    %94 = vmatpush1.msra.mxu0 0.0
    %95 = vmatprep.subr.mxu0 0.0
    %96 = vmatpush1.msra.mxu0 0.0
    %97 = vmatprep.subr.mxu0 0.0
    %98 = vmatpush1.msra.mxu0 0.0
    %99 = vmatprep.subr.mxu0 0.0
    %100 = vmatpush1.msra.mxu0 0.0
    %101 = vmatprep.subr.mxu0 0.0
    %102 = vmatpush1.msra.mxu0 0.0
    %103 = vmatprep.subr.mxu0 0.0
    %104 = vmatpush1.msra.mxu0 0.0
    %105 = vmatprep.subr.mxu0 0.0
    %106 = vmatpush1.msra.mxu0 0.0
    %107 = vmatprep.subr.mxu0 0.0
    %108 = vmatpush1.msra.mxu0 0.0
    %109 = vmatprep.subr.mxu0 0.0
    %110 = vmatpush1.msra.mxu0 0.0
    %111 = vmatprep.subr.mxu0 0.0
    %112 = vmatpush1.msra.mxu0 0.0
    %113 = vmatprep.subr.mxu0 0.0
    %114 = vmatpush1.msra.mxu0 0.0
    %115 = vmatprep.subr.mxu0 0.0
    %116 = vmatpush1.msra.mxu0 0.0
    %117 = vmatprep.subr.mxu0 0.0
    %118 = vmatpush1.msra.mxu0 0.0
    %119 = vmatprep.subr.mxu0 0.0
    %120 = vmatpush1.msra.mxu0 0.0
    %121 = vmatprep.subr.mxu0 0.0
    %122 = vmatpush1.msra.mxu0 0.0
    %123 = vmatprep.subr.mxu0 0.0
    %124 = vmatpush1.msra.mxu0 0.0
    %125 = vmatprep.subr.mxu0 0.0
    %126 = vmatpush1.msra.mxu0 0.0
    %127 = vmatprep.subr.mxu0 0.0
    %128 = vmatpush1.msra.mxu0 0.0
    %129 = vmatprep.subr.mxu0 0.0
    %130 = vmatpush1.msra.mxu0 0.0
    %131 = vmatprep.subr.mxu0 0.0
    %132 = vmatpush1.msra.mxu0 0.0
    %133 = vmatprep.subr.mxu0 0.0
    %134 = vmatpush1.msra.mxu0 0.0
    %135 = vmatprep.mubr.f32.mxu0 0.0
    %v136 = vand.u32 %v68, 4294901760
    %v137 = vsub.f32 %v68, %v136
    %v138 = vand.u32 %v137, 4294901760
    %v139 = vsub.f32 %v137, %v138
    %v140 = vand.u32 %v139, 4294901760
    %141 = vmatmul.mubr.f32.gmra.mrb[0].mxu0 %v140
    %v142 = vpop.f32.mrb[0].mxu0
    %v143 = vadd.f32 %v65, %v142
    %v144 = vpop.f32.mrb[0].mxu0
    %145 = vdwg.mxu0
    %146 = vmatprep.subr.mxu0 0.0
    %v147 = vand.u32 %v26, 4294901760
    %v148 = vsub.f32 %v26, %v147
    %v149 = vand.u32 %v148, 4294901760
    %v150 = vsub.f32 %v148, %v149
    %v151 = vand.u32 %v150, 4294901760
    %152 = vmatpush1.msra.mxu0 %v151
    %153 = vmatprep.subr.mxu0 0.0
    %154 = vmatpush1.msra.mxu0 0.0
    %155 = vmatprep.subr.mxu0 0.0
    %156 = vmatpush1.msra.mxu0 0.0
    %157 = vmatprep.subr.mxu0 0.0
    %158 = vmatpush1.msra.mxu0 0.0
    %159 = vmatprep.subr.mxu0 0.0
    %160 = vmatpush1.msra.mxu0 0.0
    %161 = vmatprep.subr.mxu0 0.0
    %162 = vmatpush1.msra.mxu0 0.0
    %163 = vmatprep.subr.mxu0 0.0
    %164 = vmatpush1.msra.mxu0 0.0
    %165 = vmatprep.subr.mxu0 0.0
    %166 = vmatpush1.msra.mxu0 0.0
    %167 = vmatprep.subr.mxu0 0.0
    %168 = vmatpush1.msra.mxu0 0.0
    %169 = vmatprep.subr.mxu0 0.0
    %170 = vmatpush1.msra.mxu0 0.0
    %171 = vmatprep.subr.mxu0 0.0
    %172 = vmatpush1.msra.mxu0 0.0
    %173 = vmatprep.subr.mxu0 0.0
    %174 = vmatpush1.msra.mxu0 0.0
    %175 = vmatprep.subr.mxu0 0.0
    %176 = vmatpush1.msra.mxu0 0.0
    %177 = vmatprep.subr.mxu0 0.0
    %178 = vmatpush1.msra.mxu0 0.0
    %179 = vmatprep.subr.mxu0 0.0
    %180 = vmatpush1.msra.mxu0 0.0
    %181 = vmatprep.subr.mxu0 0.0
    %182 = vmatpush1.msra.mxu0 0.0
    %183 = vmatprep.subr.mxu0 0.0
    %184 = vmatpush1.msra.mxu0 0.0
    %185 = vmatprep.subr.mxu0 0.0
    %186 = vmatpush1.msra.mxu0 0.0
    %187 = vmatprep.subr.mxu0 0.0
    %188 = vmatpush1.msra.mxu0 0.0
    %189 = vmatprep.subr.mxu0 0.0
    %190 = vmatpush1.msra.mxu0 0.0
    %191 = vmatprep.subr.mxu0 0.0
    %192 = vmatpush1.msra.mxu0 0.0
    %193 = vmatprep.subr.mxu0 0.0
    %194 = vmatpush1.msra.mxu0 0.0
    %195 = vmatprep.subr.mxu0 0.0
    %196 = vmatpush1.msra.mxu0 0.0
    %197 = vmatprep.subr.mxu0 0.0
    %198 = vmatpush1.msra.mxu0 0.0
    %199 = vmatprep.subr.mxu0 0.0
    %200 = vmatpush1.msra.mxu0 0.0
    %201 = vmatprep.subr.mxu0 0.0
    %202 = vmatpush1.msra.mxu0 0.0
    %203 = vmatprep.subr.mxu0 0.0
    %204 = vmatpush1.msra.mxu0 0.0
    %205 = vmatprep.subr.mxu0 0.0
    %206 = vmatpush1.msra.mxu0 0.0
    %207 = vmatprep.subr.mxu0 0.0
    %208 = vmatpush1.msra.mxu0 0.0
    %209 = vmatprep.subr.mxu0 0.0
    %210 = vmatpush1.msra.mxu0 0.0
    %211 = vmatprep.subr.mxu0 0.0
    %212 = vmatpush1.msra.mxu0 0.0
    %213 = vmatprep.subr.mxu0 0.0
    %214 = vmatpush1.msra.mxu0 0.0
    %215 = vmatprep.mubr.f32.mxu0 0.0
    %v216 = vand.u32 %v68, 4294901760
    %217 = vmatmul.mubr.f32.gmra.mrb[0].mxu0 %v216
    %v218 = vpop.f32.mrb[0].mxu0
    %v219 = vadd.f32 %v143, %v218
    %v220 = vpop.f32.mrb[0].mxu0
    %221 = vdwg.mxu0
    %222 = vmatprep.subr.mxu0 0.0
    %v223 = vand.u32 %v26, 4294901760
    %v224 = vsub.f32 %v26, %v223
    %225 = vmatpush1.msra.mxu0 %v224
    %226 = vmatprep.subr.mxu0 0.0
    %227 = vmatpush1.msra.mxu0 0.0
    %228 = vmatprep.subr.mxu0 0.0
    %229 = vmatpush1.msra.mxu0 0.0
    %230 = vmatprep.subr.mxu0 0.0
    %231 = vmatpush1.msra.mxu0 0.0
    %232 = vmatprep.subr.mxu0 0.0
    %233 = vmatpush1.msra.mxu0 0.0
    %234 = vmatprep.subr.mxu0 0.0
    %235 = vmatpush1.msra.mxu0 0.0
    %236 = vmatprep.subr.mxu0 0.0
    %237 = vmatpush1.msra.mxu0 0.0
    %238 = vmatprep.subr.mxu0 0.0
    %239 = vmatpush1.msra.mxu0 0.0
    %240 = vmatprep.subr.mxu0 0.0
    %241 = vmatpush1.msra.mxu0 0.0
    %242 = vmatprep.subr.mxu0 0.0
    %243 = vmatpush1.msra.mxu0 0.0
    %244 = vmatprep.subr.mxu0 0.0
    %245 = vmatpush1.msra.mxu0 0.0
    %246 = vmatprep.subr.mxu0 0.0
    %247 = vmatpush1.msra.mxu0 0.0
    %248 = vmatprep.subr.mxu0 0.0
    %249 = vmatpush1.msra.mxu0 0.0
    %250 = vmatprep.subr.mxu0 0.0
    %251 = vmatpush1.msra.mxu0 0.0
    %252 = vmatprep.subr.mxu0 0.0
    %253 = vmatpush1.msra.mxu0 0.0
    %254 = vmatprep.subr.mxu0 0.0
    %255 = vmatpush1.msra.mxu0 0.0
    %256 = vmatprep.subr.mxu0 0.0
    %257 = vmatpush1.msra.mxu0 0.0
    %258 = vmatprep.subr.mxu0 0.0
    %259 = vmatpush1.msra.mxu0 0.0
    %260 = vmatprep.subr.mxu0 0.0
    %261 = vmatpush1.msra.mxu0 0.0
    %262 = vmatprep.subr.mxu0 0.0
    %263 = vmatpush1.msra.mxu0 0.0
    %264 = vmatprep.subr.mxu0 0.0
    %265 = vmatpush1.msra.mxu0 0.0
    %266 = vmatprep.subr.mxu0 0.0
    %267 = vmatpush1.msra.mxu0 0.0
    %268 = vmatprep.subr.mxu0 0.0
    %269 = vmatpush1.msra.mxu0 0.0
    %270 = vmatprep.subr.mxu0 0.0
    %271 = vmatpush1.msra.mxu0 0.0
    %272 = vmatprep.subr.mxu0 0.0
    %273 = vmatpush1.msra.mxu0 0.0
    %274 = vmatprep.subr.mxu0 0.0
    %275 = vmatpush1.msra.mxu0 0.0
    %276 = vmatprep.subr.mxu0 0.0
    %277 = vmatpush1.msra.mxu0 0.0
    %278 = vmatprep.subr.mxu0 0.0
    %279 = vmatpush1.msra.mxu0 0.0
    %280 = vmatprep.subr.mxu0 0.0
    %281 = vmatpush1.msra.mxu0 0.0
    %282 = vmatprep.subr.mxu0 0.0
    %283 = vmatpush1.msra.mxu0 0.0
    %284 = vmatprep.subr.mxu0 0.0
    %285 = vmatpush1.msra.mxu0 0.0
    %286 = vmatprep.subr.mxu0 0.0
    %287 = vmatpush1.msra.mxu0 0.0
    %288 = vmatprep.mubr.f32.mxu0 0.0
    %v289 = vand.u32 %v68, 4294901760
    %v290 = vsub.f32 %v68, %v289
    %291 = vmatmul.mubr.f32.gmra.mrb[0].mxu0 %v290
    %v292 = vpop.f32.mrb[0].mxu0
    %v293 = vadd.f32 %v219, %v292
    %v294 = vpop.f32.mrb[0].mxu0
    %295 = vdwg.mxu0
    %296 = vmatprep.subr.mxu0 0.0
    %v297 = vand.u32 %v26, 4294901760
    %298 = vmatpush1.msra.mxu0 %v297
    %299 = vmatprep.subr.mxu0 0.0
    %300 = vmatpush1.msra.mxu0 0.0
    %301 = vmatprep.subr.mxu0 0.0
    %302 = vmatpush1.msra.mxu0 0.0
    %303 = vmatprep.subr.mxu0 0.0
    %304 = vmatpush1.msra.mxu0 0.0
    %305 = vmatprep.subr.mxu0 0.0
    %306 = vmatpush1.msra.mxu0 0.0
    %307 = vmatprep.subr.mxu0 0.0
    %308 = vmatpush1.msra.mxu0 0.0
    %309 = vmatprep.subr.mxu0 0.0
    %310 = vmatpush1.msra.mxu0 0.0
    %311 = vmatprep.subr.mxu0 0.0
    %312 = vmatpush1.msra.mxu0 0.0
    %313 = vmatprep.subr.mxu0 0.0
    %314 = vmatpush1.msra.mxu0 0.0
    %315 = vmatprep.subr.mxu0 0.0
    %316 = vmatpush1.msra.mxu0 0.0
    %317 = vmatprep.subr.mxu0 0.0
    %318 = vmatpush1.msra.mxu0 0.0
    %319 = vmatprep.subr.mxu0 0.0
    %320 = vmatpush1.msra.mxu0 0.0
    %321 = vmatprep.subr.mxu0 0.0
    %322 = vmatpush1.msra.mxu0 0.0
    %323 = vmatprep.subr.mxu0 0.0
    %324 = vmatpush1.msra.mxu0 0.0
    %325 = vmatprep.subr.mxu0 0.0
    %326 = vmatpush1.msra.mxu0 0.0
    %327 = vmatprep.subr.mxu0 0.0
    %328 = vmatpush1.msra.mxu0 0.0
    %329 = vmatprep.subr.mxu0 0.0
    %330 = vmatpush1.msra.mxu0 0.0
    %331 = vmatprep.subr.mxu0 0.0
    %332 = vmatpush1.msra.mxu0 0.0
    %333 = vmatprep.subr.mxu0 0.0
    %334 = vmatpush1.msra.mxu0 0.0
    %335 = vmatprep.subr.mxu0 0.0
    %336 = vmatpush1.msra.mxu0 0.0
    %337 = vmatprep.subr.mxu0 0.0
    %338 = vmatpush1.msra.mxu0 0.0
    %339 = vmatprep.subr.mxu0 0.0
    %340 = vmatpush1.msra.mxu0 0.0
    %341 = vmatprep.subr.mxu0 0.0
    %342 = vmatpush1.msra.mxu0 0.0
    %343 = vmatprep.subr.mxu0 0.0
    %344 = vmatpush1.msra.mxu0 0.0
    %345 = vmatprep.subr.mxu0 0.0
    %346 = vmatpush1.msra.mxu0 0.0
    %347 = vmatprep.subr.mxu0 0.0
    %348 = vmatpush1.msra.mxu0 0.0
    %349 = vmatprep.subr.mxu0 0.0
    %350 = vmatpush1.msra.mxu0 0.0
    %351 = vmatprep.subr.mxu0 0.0
    %352 = vmatpush1.msra.mxu0 0.0
    %353 = vmatprep.subr.mxu0 0.0
    %354 = vmatpush1.msra.mxu0 0.0
    %355 = vmatprep.subr.mxu0 0.0
    %356 = vmatpush1.msra.mxu0 0.0
    %357 = vmatprep.subr.mxu0 0.0
    %358 = vmatpush1.msra.mxu0 0.0
    %359 = vmatprep.subr.mxu0 0.0
    %360 = vmatpush1.msra.mxu0 0.0
    %361 = vmatprep.mubr.f32.mxu0 0.0
    %v362 = vand.u32 %v68, 4294901760
    %v363 = vsub.f32 %v68, %v362
    %v364 = vand.u32 %v363, 4294901760
    %365 = vmatmul.mubr.f32.gmra.mrb[0].mxu0 %v364
    %v366 = vpop.f32.mrb[0].mxu0
    %v367 = vadd.f32 %v293, %v366
    %v368 = vpop.f32.mrb[0].mxu0
    %369 = vdwg.mxu0
    %370 = vmatprep.subr.mxu0 0.0
    %v371 = vand.u32 %v26, 4294901760
    %v372 = vsub.f32 %v26, %v371
    %v373 = vand.u32 %v372, 4294901760
    %374 = vmatpush1.msra.mxu0 %v373
    %375 = vmatprep.subr.mxu0 0.0
    %376 = vmatpush1.msra.mxu0 0.0
    %377 = vmatprep.subr.mxu0 0.0
    %378 = vmatpush1.msra.mxu0 0.0
    %379 = vmatprep.subr.mxu0 0.0
    %380 = vmatpush1.msra.mxu0 0.0
    %381 = vmatprep.subr.mxu0 0.0
    %382 = vmatpush1.msra.mxu0 0.0
    %383 = vmatprep.subr.mxu0 0.0
    %384 = vmatpush1.msra.mxu0 0.0
    %385 = vmatprep.subr.mxu0 0.0
    %386 = vmatpush1.msra.mxu0 0.0
    %387 = vmatprep.subr.mxu0 0.0
    %388 = vmatpush1.msra.mxu0 0.0
    %389 = vmatprep.subr.mxu0 0.0
    %390 = vmatpush1.msra.mxu0 0.0
    %391 = vmatprep.subr.mxu0 0.0
    %392 = vmatpush1.msra.mxu0 0.0
    %393 = vmatprep.subr.mxu0 0.0
    %394 = vmatpush1.msra.mxu0 0.0
    %395 = vmatprep.subr.mxu0 0.0
    %396 = vmatpush1.msra.mxu0 0.0
    %397 = vmatprep.subr.mxu0 0.0
    %398 = vmatpush1.msra.mxu0 0.0
    %399 = vmatprep.subr.mxu0 0.0
    %400 = vmatpush1.msra.mxu0 0.0
    %401 = vmatprep.subr.mxu0 0.0
    %402 = vmatpush1.msra.mxu0 0.0
    %403 = vmatprep.subr.mxu0 0.0
    %404 = vmatpush1.msra.mxu0 0.0
    %405 = vmatprep.subr.mxu0 0.0
    %406 = vmatpush1.msra.mxu0 0.0
    %407 = vmatprep.subr.mxu0 0.0
    %408 = vmatpush1.msra.mxu0 0.0
    %409 = vmatprep.subr.mxu0 0.0
    %410 = vmatpush1.msra.mxu0 0.0
    %411 = vmatprep.subr.mxu0 0.0
    %412 = vmatpush1.msra.mxu0 0.0
    %413 = vmatprep.subr.mxu0 0.0
    %414 = vmatpush1.msra.mxu0 0.0
    %415 = vmatprep.subr.mxu0 0.0
    %416 = vmatpush1.msra.mxu0 0.0
    %417 = vmatprep.subr.mxu0 0.0
    %418 = vmatpush1.msra.mxu0 0.0
    %419 = vmatprep.subr.mxu0 0.0
    %420 = vmatpush1.msra.mxu0 0.0
    %421 = vmatprep.subr.mxu0 0.0
    %422 = vmatpush1.msra.mxu0 0.0
    %423 = vmatprep.subr.mxu0 0.0
    %424 = vmatpush1.msra.mxu0 0.0
    %425 = vmatprep.subr.mxu0 0.0
    %426 = vmatpush1.msra.mxu0 0.0
    %427 = vmatprep.subr.mxu0 0.0
    %428 = vmatpush1.msra.mxu0 0.0
    %429 = vmatprep.subr.mxu0 0.0
    %430 = vmatpush1.msra.mxu0 0.0
    %431 = vmatprep.subr.mxu0 0.0
    %432 = vmatpush1.msra.mxu0 0.0
    %433 = vmatprep.subr.mxu0 0.0
    %434 = vmatpush1.msra.mxu0 0.0
    %435 = vmatprep.subr.mxu0 0.0
    %436 = vmatpush1.msra.mxu0 0.0
    %437 = vmatprep.mubr.f32.mxu0 0.0
    %v438 = vand.u32 %v68, 4294901760
    %439 = vmatmul.mubr.f32.gmra.mrb[0].mxu0 %v438
    %v440 = vpop.f32.mrb[0].mxu0
    %v441 = vadd.f32 %v367, %v440
    %v442 = vpop.f32.mrb[0].mxu0
    %443 = vdwg.mxu0
    %444 = vmatprep.subr.mxu0 0.0
    %v445 = vand.u32 %v26, 4294901760
    %446 = vmatpush1.msra.mxu0 %v445
    %447 = vmatprep.subr.mxu0 0.0
    %448 = vmatpush1.msra.mxu0 0.0
    %449 = vmatprep.subr.mxu0 0.0
    %450 = vmatpush1.msra.mxu0 0.0
    %451 = vmatprep.subr.mxu0 0.0
    %452 = vmatpush1.msra.mxu0 0.0
    %453 = vmatprep.subr.mxu0 0.0
    %454 = vmatpush1.msra.mxu0 0.0
    %455 = vmatprep.subr.mxu0 0.0
    %456 = vmatpush1.msra.mxu0 0.0
    %457 = vmatprep.subr.mxu0 0.0
    %458 = vmatpush1.msra.mxu0 0.0
    %459 = vmatprep.subr.mxu0 0.0
    %460 = vmatpush1.msra.mxu0 0.0
    %461 = vmatprep.subr.mxu0 0.0
    %462 = vmatpush1.msra.mxu0 0.0
    %463 = vmatprep.subr.mxu0 0.0
    %464 = vmatpush1.msra.mxu0 0.0
    %465 = vmatprep.subr.mxu0 0.0
    %466 = vmatpush1.msra.mxu0 0.0
    %467 = vmatprep.subr.mxu0 0.0
    %468 = vmatpush1.msra.mxu0 0.0
    %469 = vmatprep.subr.mxu0 0.0
    %470 = vmatpush1.msra.mxu0 0.0
    %471 = vmatprep.subr.mxu0 0.0
    %472 = vmatpush1.msra.mxu0 0.0
    %473 = vmatprep.subr.mxu0 0.0
    %474 = vmatpush1.msra.mxu0 0.0
    %475 = vmatprep.subr.mxu0 0.0
    %476 = vmatpush1.msra.mxu0 0.0
    %477 = vmatprep.subr.mxu0 0.0
    %478 = vmatpush1.msra.mxu0 0.0
    %479 = vmatprep.subr.mxu0 0.0
    %480 = vmatpush1.msra.mxu0 0.0
    %481 = vmatprep.subr.mxu0 0.0
    %482 = vmatpush1.msra.mxu0 0.0
    %483 = vmatprep.subr.mxu0 0.0
    %484 = vmatpush1.msra.mxu0 0.0
    %485 = vmatprep.subr.mxu0 0.0
    %486 = vmatpush1.msra.mxu0 0.0
    %487 = vmatprep.subr.mxu0 0.0
    %488 = vmatpush1.msra.mxu0 0.0
    %489 = vmatprep.subr.mxu0 0.0
    %490 = vmatpush1.msra.mxu0 0.0
    %491 = vmatprep.subr.mxu0 0.0
    %492 = vmatpush1.msra.mxu0 0.0
    %493 = vmatprep.subr.mxu0 0.0
    %494 = vmatpush1.msra.mxu0 0.0
    %495 = vmatprep.subr.mxu0 0.0
    %496 = vmatpush1.msra.mxu0 0.0
    %497 = vmatprep.subr.mxu0 0.0
    %498 = vmatpush1.msra.mxu0 0.0
    %499 = vmatprep.subr.mxu0 0.0
    %500 = vmatpush1.msra.mxu0 0.0
    %501 = vmatprep.subr.mxu0 0.0
    %502 = vmatpush1.msra.mxu0 0.0
    %503 = vmatprep.subr.mxu0 0.0
    %504 = vmatpush1.msra.mxu0 0.0
    %505 = vmatprep.subr.mxu0 0.0
    %506 = vmatpush1.msra.mxu0 0.0
    %507 = vmatprep.subr.mxu0 0.0
    %508 = vmatpush1.msra.mxu0 0.0
    %509 = vmatprep.mubr.f32.mxu0 0.0
    %v510 = vand.u32 %v68, 4294901760
    %511 = vmatmul.mubr.f32.gmra.mrb[0].mxu0 %v510
    %v512 = vpop.f32.mrb[0].mxu0
    %v513 = vadd.f32 %v441, %v512
    %v514 = vpop.f32.mrb[0].mxu0
    %515 = vdwg.mxu0
    %v516 = vmax.f32 %v513, 0.0
    %v517 = vlaneseq
    %v518 = vshrl.u32 %v517, 7
    %v519 = vsub.s32 0, %v518
    %v520 = vrot.slane %v44, %v519
    %521 = vmatprep.subr.mxu0 0.0
    %v522 = vand.u32 %v28, 4294901760
    %523 = vmatpush1.msra.mxu0 %v522
    %524 = vmatprep.subr.mxu0 0.0
    %v525 = vand.u32 %v29, 4294901760
    %526 = vmatpush1.msra.mxu0 %v525
    %527 = vmatprep.subr.mxu0 0.0
    %v528 = vand.u32 %v30, 4294901760
    %529 = vmatpush1.msra.mxu0 %v528
    %530 = vmatprep.subr.mxu0 0.0
    %v531 = vand.u32 %v31, 4294901760
    %532 = vmatpush1.msra.mxu0 %v531
    %533 = vmatprep.subr.mxu0 0.0
    %v534 = vand.u32 %v32, 4294901760
    %535 = vmatpush1.msra.mxu0 %v534
    %536 = vmatprep.subr.mxu0 0.0
    %v537 = vand.u32 %v33, 4294901760
    %538 = vmatpush1.msra.mxu0 %v537
    %539 = vmatprep.subr.mxu0 0.0
    %v540 = vand.u32 %v34, 4294901760
    %541 = vmatpush1.msra.mxu0 %v540
    %542 = vmatprep.subr.mxu0 0.0
    %v543 = vand.u32 %v35, 4294901760
    %544 = vmatpush1.msra.mxu0 %v543
    %545 = vmatprep.subr.mxu0 0.0
    %v546 = vand.u32 %v36, 4294901760
    %547 = vmatpush1.msra.mxu0 %v546
    %548 = vmatprep.subr.mxu0 0.0
    %v549 = vand.u32 %v37, 4294901760
    %550 = vmatpush1.msra.mxu0 %v549
    %551 = vmatprep.subr.mxu0 0.0
    %v552 = vand.u32 %v38, 4294901760
    %553 = vmatpush1.msra.mxu0 %v552
    %554 = vmatprep.subr.mxu0 0.0
    %v555 = vand.u32 %v39, 4294901760
    %556 = vmatpush1.msra.mxu0 %v555
    %557 = vmatprep.subr.mxu0 0.0
    %v558 = vand.u32 %v40, 4294901760
    %559 = vmatpush1.msra.mxu0 %v558
    %560 = vmatprep.subr.mxu0 0.0
    %v561 = vand.u32 %v41, 4294901760
    %562 = vmatpush1.msra.mxu0 %v561
    %563 = vmatprep.subr.mxu0 0.0
    %v564 = vand.u32 %v42, 4294901760
    %565 = vmatpush1.msra.mxu0 %v564
    %566 = vmatprep.subr.mxu0 0.0
    %v567 = vand.u32 %v43, 4294901760
    %568 = vmatpush1.msra.mxu0 %v567
    %569 = vmatprep.subr.mxu0 0.0
    %570 = vmatpush1.msra.mxu0 0.0
    %571 = vmatprep.subr.mxu0 0.0
    %572 = vmatpush1.msra.mxu0 0.0
    %573 = vmatprep.subr.mxu0 0.0
    %574 = vmatpush1.msra.mxu0 0.0
    %575 = vmatprep.subr.mxu0 0.0
    %576 = vmatpush1.msra.mxu0 0.0
    %577 = vmatprep.subr.mxu0 0.0
    %578 = vmatpush1.msra.mxu0 0.0
    %579 = vmatprep.subr.mxu0 0.0
    %580 = vmatpush1.msra.mxu0 0.0
    %581 = vmatprep.subr.mxu0 0.0
    %582 = vmatpush1.msra.mxu0 0.0
    %583 = vmatprep.subr.mxu0 0.0
    %584 = vmatpush1.msra.mxu0 0.0
    %585 = vmatprep.subr.mxu0 0.0
    %586 = vmatpush1.msra.mxu0 0.0
    %587 = vmatprep.subr.mxu0 0.0
    %588 = vmatpush1.msra.mxu0 0.0
    %589 = vmatprep.subr.mxu0 0.0
    %590 = vmatpush1.msra.mxu0 0.0
    %591 = vmatprep.subr.mxu0 0.0
    %592 = vmatpush1.msra.mxu0 0.0
    %593 = vmatprep.subr.mxu0 0.0
    %594 = vmatpush1.msra.mxu0 0.0
    %595 = vmatprep.subr.mxu0 0.0
    %596 = vmatpush1.msra.mxu0 0.0
    %597 = vmatprep.subr.mxu0 0.0
    %598 = vmatpush1.msra.mxu0 0.0
    %599 = vmatprep.subr.mxu0 0.0
    %600 = vmatpush1.msra.mxu0 0.0
    %601 = vmatprep.mubr.f32.mxu0 0.0
    %v602 = vand.u32 %v516, 4294901760
    %v603 = vsub.f32 %v516, %v602
    %v604 = vand.u32 %v603, 4294901760
    %v605 = vsub.f32 %v603, %v604
    %v606 = vand.u32 %v605, 4294901760
    %607 = vmatmul.mubr.f32.gmra.mrb[0].mxu0 %v606
    %v608 = vpop.f32.mrb[0].mxu0
    %v609 = vadd.f32 %v520, %v608
    %v610 = vpop.f32.mrb[0].mxu0
    %611 = vdwg.mxu0
    %612 = vmatprep.subr.mxu0 0.0
    %v613 = vand.u32 %v28, 4294901760
    %v614 = vsub.f32 %v28, %v613
    %v615 = vand.u32 %v614, 4294901760
    %v616 = vsub.f32 %v614, %v615
    %v617 = vand.u32 %v616, 4294901760
    %618 = vmatpush1.msra.mxu0 %v617
    %619 = vmatprep.subr.mxu0 0.0
    %v620 = vand.u32 %v29, 4294901760
    %v621 = vsub.f32 %v29, %v620
    %v622 = vand.u32 %v621, 4294901760
    %v623 = vsub.f32 %v621, %v622
    %v624 = vand.u32 %v623, 4294901760
    %625 = vmatpush1.msra.mxu0 %v624
    %626 = vmatprep.subr.mxu0 0.0
    %v627 = vand.u32 %v30, 4294901760
    %v628 = vsub.f32 %v30, %v627
    %v629 = vand.u32 %v628, 4294901760
    %v630 = vsub.f32 %v628, %v629
    %v631 = vand.u32 %v630, 4294901760
    %632 = vmatpush1.msra.mxu0 %v631
    %633 = vmatprep.subr.mxu0 0.0
    %v634 = vand.u32 %v31, 4294901760
    %v635 = vsub.f32 %v31, %v634
    %v636 = vand.u32 %v635, 4294901760
    %v637 = vsub.f32 %v635, %v636
    %v638 = vand.u32 %v637, 4294901760
    %639 = vmatpush1.msra.mxu0 %v638
    %640 = vmatprep.subr.mxu0 0.0
    %v641 = vand.u32 %v32, 4294901760
    %v642 = vsub.f32 %v32, %v641
    %v643 = vand.u32 %v642, 4294901760
    %v644 = vsub.f32 %v642, %v643
    %v645 = vand.u32 %v644, 4294901760
    %646 = vmatpush1.msra.mxu0 %v645
    %647 = vmatprep.subr.mxu0 0.0
    %v648 = vand.u32 %v33, 4294901760
    %v649 = vsub.f32 %v33, %v648
    %v650 = vand.u32 %v649, 4294901760
    %v651 = vsub.f32 %v649, %v650
    %v652 = vand.u32 %v651, 4294901760
    %653 = vmatpush1.msra.mxu0 %v652
    %654 = vmatprep.subr.mxu0 0.0
    %v655 = vand.u32 %v34, 4294901760
    %v656 = vsub.f32 %v34, %v655
    %v657 = vand.u32 %v656, 4294901760
    %v658 = vsub.f32 %v656, %v657
    %v659 = vand.u32 %v658, 4294901760
    %660 = vmatpush1.msra.mxu0 %v659
    %661 = vmatprep.subr.mxu0 0.0
    %v662 = vand.u32 %v35, 4294901760
    %v663 = vsub.f32 %v35, %v662
    %v664 = vand.u32 %v663, 4294901760
    %v665 = vsub.f32 %v663, %v664
    %v666 = vand.u32 %v665, 4294901760
    %667 = vmatpush1.msra.mxu0 %v666
    %668 = vmatprep.subr.mxu0 0.0
    %v669 = vand.u32 %v36, 4294901760
    %v670 = vsub.f32 %v36, %v669
    %v671 = vand.u32 %v670, 4294901760
    %v672 = vsub.f32 %v670, %v671
    %v673 = vand.u32 %v672, 4294901760
    %674 = vmatpush1.msra.mxu0 %v673
    %675 = vmatprep.subr.mxu0 0.0
    %v676 = vand.u32 %v37, 4294901760
    %v677 = vsub.f32 %v37, %v676
    %v678 = vand.u32 %v677, 4294901760
    %v679 = vsub.f32 %v677, %v678
    %v680 = vand.u32 %v679, 4294901760
    %681 = vmatpush1.msra.mxu0 %v680
    %682 = vmatprep.subr.mxu0 0.0
    %v683 = vand.u32 %v38, 4294901760
    %v684 = vsub.f32 %v38, %v683
    %v685 = vand.u32 %v684, 4294901760
    %v686 = vsub.f32 %v684, %v685
    %v687 = vand.u32 %v686, 4294901760
    %688 = vmatpush1.msra.mxu0 %v687
    %689 = vmatprep.subr.mxu0 0.0
    %v690 = vand.u32 %v39, 4294901760
    %v691 = vsub.f32 %v39, %v690
    %v692 = vand.u32 %v691, 4294901760
    %v693 = vsub.f32 %v691, %v692
    %v694 = vand.u32 %v693, 4294901760
    %695 = vmatpush1.msra.mxu0 %v694
    %696 = vmatprep.subr.mxu0 0.0
    %v697 = vand.u32 %v40, 4294901760
    %v698 = vsub.f32 %v40, %v697
    %v699 = vand.u32 %v698, 4294901760
    %v700 = vsub.f32 %v698, %v699
    %v701 = vand.u32 %v700, 4294901760
    %702 = vmatpush1.msra.mxu0 %v701
    %703 = vmatprep.subr.mxu0 0.0
    %v704 = vand.u32 %v41, 4294901760
    %v705 = vsub.f32 %v41, %v704
    %v706 = vand.u32 %v705, 4294901760
    %v707 = vsub.f32 %v705, %v706
    %v708 = vand.u32 %v707, 4294901760
    %709 = vmatpush1.msra.mxu0 %v708
    %710 = vmatprep.subr.mxu0 0.0
    %v711 = vand.u32 %v42, 4294901760
    %v712 = vsub.f32 %v42, %v711
    %v713 = vand.u32 %v712, 4294901760
    %v714 = vsub.f32 %v712, %v713
    %v715 = vand.u32 %v714, 4294901760
    %716 = vmatpush1.msra.mxu0 %v715
    %717 = vmatprep.subr.mxu0 0.0
    %v718 = vand.u32 %v43, 4294901760
    %v719 = vsub.f32 %v43, %v718
    %v720 = vand.u32 %v719, 4294901760
    %v721 = vsub.f32 %v719, %v720
    %v722 = vand.u32 %v721, 4294901760
    %723 = vmatpush1.msra.mxu0 %v722
    %724 = vmatprep.subr.mxu0 0.0
    %725 = vmatpush1.msra.mxu0 0.0
    %726 = vmatprep.subr.mxu0 0.0
    %727 = vmatpush1.msra.mxu0 0.0
    %728 = vmatprep.subr.mxu0 0.0
    %729 = vmatpush1.msra.mxu0 0.0
    %730 = vmatprep.subr.mxu0 0.0
    %731 = vmatpush1.msra.mxu0 0.0
    %732 = vmatprep.subr.mxu0 0.0
    %733 = vmatpush1.msra.mxu0 0.0
    %734 = vmatprep.subr.mxu0 0.0
    %735 = vmatpush1.msra.mxu0 0.0
    %736 = vmatprep.subr.mxu0 0.0
    %737 = vmatpush1.msra.mxu0 0.0
    %738 = vmatprep.subr.mxu0 0.0
    %739 = vmatpush1.msra.mxu0 0.0
    %740 = vmatprep.subr.mxu0 0.0
    %741 = vmatpush1.msra.mxu0 0.0
    %742 = vmatprep.subr.mxu0 0.0
    %743 = vmatpush1.msra.mxu0 0.0
    %744 = vmatprep.subr.mxu0 0.0
    %745 = vmatpush1.msra.mxu0 0.0
    %746 = vmatprep.subr.mxu0 0.0
    %747 = vmatpush1.msra.mxu0 0.0
    %748 = vmatprep.subr.mxu0 0.0
    %749 = vmatpush1.msra.mxu0 0.0
    %750 = vmatprep.subr.mxu0 0.0
    %751 = vmatpush1.msra.mxu0 0.0
    %752 = vmatprep.subr.mxu0 0.0
    %753 = vmatpush1.msra.mxu0 0.0
    %754 = vmatprep.subr.mxu0 0.0
    %755 = vmatpush1.msra.mxu0 0.0
    %756 = vmatprep.mubr.f32.mxu0 0.0
    %v757 = vand.u32 %v516, 4294901760
    %758 = vmatmul.mubr.f32.gmra.mrb[0].mxu0 %v757
    %v759 = vpop.f32.mrb[0].mxu0
    %v760 = vadd.f32 %v609, %v759
    %v761 = vpop.f32.mrb[0].mxu0
    %762 = vdwg.mxu0
    %763 = vmatprep.subr.mxu0 0.0
    %v764 = vand.u32 %v28, 4294901760
    %v765 = vsub.f32 %v28, %v764
    %766 = vmatpush1.msra.mxu0 %v765
    %767 = vmatprep.subr.mxu0 0.0
    %v768 = vand.u32 %v29, 4294901760
    %v769 = vsub.f32 %v29, %v768
    %770 = vmatpush1.msra.mxu0 %v769
    %771 = vmatprep.subr.mxu0 0.0
    %v772 = vand.u32 %v30, 4294901760
    %v773 = vsub.f32 %v30, %v772
    %774 = vmatpush1.msra.mxu0 %v773
    %775 = vmatprep.subr.mxu0 0.0
    %v776 = vand.u32 %v31, 4294901760
    %v777 = vsub.f32 %v31, %v776
    %778 = vmatpush1.msra.mxu0 %v777
    %779 = vmatprep.subr.mxu0 0.0
    %v780 = vand.u32 %v32, 4294901760
    %v781 = vsub.f32 %v32, %v780
    %782 = vmatpush1.msra.mxu0 %v781
    %783 = vmatprep.subr.mxu0 0.0
    %v784 = vand.u32 %v33, 4294901760
    %v785 = vsub.f32 %v33, %v784
    %786 = vmatpush1.msra.mxu0 %v785
    %787 = vmatprep.subr.mxu0 0.0
    %v788 = vand.u32 %v34, 4294901760
    %v789 = vsub.f32 %v34, %v788
    %790 = vmatpush1.msra.mxu0 %v789
    %791 = vmatprep.subr.mxu0 0.0
    %v792 = vand.u32 %v35, 4294901760
    %v793 = vsub.f32 %v35, %v792
    %794 = vmatpush1.msra.mxu0 %v793
    %795 = vmatprep.subr.mxu0 0.0
    %v796 = vand.u32 %v36, 4294901760
    %v797 = vsub.f32 %v36, %v796
    %798 = vmatpush1.msra.mxu0 %v797
    %799 = vmatprep.subr.mxu0 0.0
    %v800 = vand.u32 %v37, 4294901760
    %v801 = vsub.f32 %v37, %v800
    %802 = vmatpush1.msra.mxu0 %v801
    %803 = vmatprep.subr.mxu0 0.0
    %v804 = vand.u32 %v38, 4294901760
    %v805 = vsub.f32 %v38, %v804
    %806 = vmatpush1.msra.mxu0 %v805
    %807 = vmatprep.subr.mxu0 0.0
    %v808 = vand.u32 %v39, 4294901760
    %v809 = vsub.f32 %v39, %v808
    %810 = vmatpush1.msra.mxu0 %v809
    %811 = vmatprep.subr.mxu0 0.0
    %v812 = vand.u32 %v40, 4294901760
    %v813 = vsub.f32 %v40, %v812
    %814 = vmatpush1.msra.mxu0 %v813
    %815 = vmatprep.subr.mxu0 0.0
    %v816 = vand.u32 %v41, 4294901760
    %v817 = vsub.f32 %v41, %v816
    %818 = vmatpush1.msra.mxu0 %v817
    %819 = vmatprep.subr.mxu0 0.0
    %v820 = vand.u32 %v42, 4294901760
    %v821 = vsub.f32 %v42, %v820
    %822 = vmatpush1.msra.mxu0 %v821
    %823 = vmatprep.subr.mxu0 0.0
    %v824 = vand.u32 %v43, 4294901760
    %v825 = vsub.f32 %v43, %v824
    %826 = vmatpush1.msra.mxu0 %v825
    %827 = vmatprep.subr.mxu0 0.0
    %828 = vmatpush1.msra.mxu0 0.0
    %829 = vmatprep.subr.mxu0 0.0
    %830 = vmatpush1.msra.mxu0 0.0
    %831 = vmatprep.subr.mxu0 0.0
    %832 = vmatpush1.msra.mxu0 0.0
    %833 = vmatprep.subr.mxu0 0.0
    %834 = vmatpush1.msra.mxu0 0.0
    %835 = vmatprep.subr.mxu0 0.0
    %836 = vmatpush1.msra.mxu0 0.0
    %837 = vmatprep.subr.mxu0 0.0
    %838 = vmatpush1.msra.mxu0 0.0
    %839 = vmatprep.subr.mxu0 0.0
    %840 = vmatpush1.msra.mxu0 0.0
    %841 = vmatprep.subr.mxu0 0.0
    %842 = vmatpush1.msra.mxu0 0.0
    %843 = vmatprep.subr.mxu0 0.0
    %844 = vmatpush1.msra.mxu0 0.0
    %845 = vmatprep.subr.mxu0 0.0
    %846 = vmatpush1.msra.mxu0 0.0
    %847 = vmatprep.subr.mxu0 0.0
    %848 = vmatpush1.msra.mxu0 0.0
    %849 = vmatprep.subr.mxu0 0.0
    %850 = vmatpush1.msra.mxu0 0.0
    %851 = vmatprep.subr.mxu0 0.0
    %852 = vmatpush1.msra.mxu0 0.0
    %853 = vmatprep.subr.mxu0 0.0
    %854 = vmatpush1.msra.mxu0 0.0
    %855 = vmatprep.subr.mxu0 0.0
    %856 = vmatpush1.msra.mxu0 0.0
    %857 = vmatprep.subr.mxu0 0.0
    %858 = vmatpush1.msra.mxu0 0.0
    %859 = vmatprep.mubr.f32.mxu0 0.0
    %v860 = vand.u32 %v516, 4294901760
    %v861 = vsub.f32 %v516, %v860
    %862 = vmatmul.mubr.f32.gmra.mrb[0].mxu0 %v861
    %v863 = vpop.f32.mrb[0].mxu0
    %v864 = vadd.f32 %v760, %v863
    %v865 = vpop.f32.mrb[0].mxu0
    %866 = vdwg.mxu0
    %867 = vmatprep.subr.mxu0 0.0
    %v868 = vand.u32 %v28, 4294901760
    %869 = vmatpush1.msra.mxu0 %v868
    %870 = vmatprep.subr.mxu0 0.0
    %v871 = vand.u32 %v29, 4294901760
    %872 = vmatpush1.msra.mxu0 %v871
    %873 = vmatprep.subr.mxu0 0.0
    %v874 = vand.u32 %v30, 4294901760
    %875 = vmatpush1.msra.mxu0 %v874
    %876 = vmatprep.subr.mxu0 0.0
    %v877 = vand.u32 %v31, 4294901760
    %878 = vmatpush1.msra.mxu0 %v877
    %879 = vmatprep.subr.mxu0 0.0
    %v880 = vand.u32 %v32, 4294901760
    %881 = vmatpush1.msra.mxu0 %v880
    %882 = vmatprep.subr.mxu0 0.0
    %v883 = vand.u32 %v33, 4294901760
    %884 = vmatpush1.msra.mxu0 %v883
    %885 = vmatprep.subr.mxu0 0.0
    %v886 = vand.u32 %v34, 4294901760
    %887 = vmatpush1.msra.mxu0 %v886
    %888 = vmatprep.subr.mxu0 0.0
    %v889 = vand.u32 %v35, 4294901760
    %890 = vmatpush1.msra.mxu0 %v889
    %891 = vmatprep.subr.mxu0 0.0
    %v892 = vand.u32 %v36, 4294901760
    %893 = vmatpush1.msra.mxu0 %v892
    %894 = vmatprep.subr.mxu0 0.0
    %v895 = vand.u32 %v37, 4294901760
    %896 = vmatpush1.msra.mxu0 %v895
    %897 = vmatprep.subr.mxu0 0.0
    %v898 = vand.u32 %v38, 4294901760
    %899 = vmatpush1.msra.mxu0 %v898
    %900 = vmatprep.subr.mxu0 0.0
    %v901 = vand.u32 %v39, 4294901760
    %902 = vmatpush1.msra.mxu0 %v901
    %903 = vmatprep.subr.mxu0 0.0
    %v904 = vand.u32 %v40, 4294901760
    %905 = vmatpush1.msra.mxu0 %v904
    %906 = vmatprep.subr.mxu0 0.0
    %v907 = vand.u32 %v41, 4294901760
    %908 = vmatpush1.msra.mxu0 %v907
    %909 = vmatprep.subr.mxu0 0.0
    %v910 = vand.u32 %v42, 4294901760
    %911 = vmatpush1.msra.mxu0 %v910
    %912 = vmatprep.subr.mxu0 0.0
    %v913 = vand.u32 %v43, 4294901760
    %914 = vmatpush1.msra.mxu0 %v913
    %915 = vmatprep.subr.mxu0 0.0
    %916 = vmatpush1.msra.mxu0 0.0
    %917 = vmatprep.subr.mxu0 0.0
    %918 = vmatpush1.msra.mxu0 0.0
    %919 = vmatprep.subr.mxu0 0.0
    %920 = vmatpush1.msra.mxu0 0.0
    %921 = vmatprep.subr.mxu0 0.0
    %922 = vmatpush1.msra.mxu0 0.0
    %923 = vmatprep.subr.mxu0 0.0
    %924 = vmatpush1.msra.mxu0 0.0
    %925 = vmatprep.subr.mxu0 0.0
    %926 = vmatpush1.msra.mxu0 0.0
    %927 = vmatprep.subr.mxu0 0.0
    %928 = vmatpush1.msra.mxu0 0.0
    %929 = vmatprep.subr.mxu0 0.0
    %930 = vmatpush1.msra.mxu0 0.0
    %931 = vmatprep.subr.mxu0 0.0
    %932 = vmatpush1.msra.mxu0 0.0
    %933 = vmatprep.subr.mxu0 0.0
    %934 = vmatpush1.msra.mxu0 0.0
    %935 = vmatprep.subr.mxu0 0.0
    %936 = vmatpush1.msra.mxu0 0.0
    %937 = vmatprep.subr.mxu0 0.0
    %938 = vmatpush1.msra.mxu0 0.0
    %939 = vmatprep.subr.mxu0 0.0
    %940 = vmatpush1.msra.mxu0 0.0
    %941 = vmatprep.subr.mxu0 0.0
    %942 = vmatpush1.msra.mxu0 0.0
    %943 = vmatprep.subr.mxu0 0.0
    %944 = vmatpush1.msra.mxu0 0.0
    %945 = vmatprep.subr.mxu0 0.0
    %946 = vmatpush1.msra.mxu0 0.0
    %947 = vmatprep.mubr.f32.mxu0 0.0
    %v948 = vand.u32 %v516, 4294901760
    %v949 = vsub.f32 %v516, %v948
    %v950 = vand.u32 %v949, 4294901760
    %951 = vmatmul.mubr.f32.gmra.mrb[0].mxu0 %v950
    %v952 = vpop.f32.mrb[0].mxu0
    %v953 = vadd.f32 %v864, %v952
    %v954 = vpop.f32.mrb[0].mxu0
    %955 = vdwg.mxu0
    %956 = vmatprep.subr.mxu0 0.0
    %v957 = vand.u32 %v28, 4294901760
    %v958 = vsub.f32 %v28, %v957
    %v959 = vand.u32 %v958, 4294901760
    %960 = vmatpush1.msra.mxu0 %v959
    %961 = vmatprep.subr.mxu0 0.0
    %v962 = vand.u32 %v29, 4294901760
    %v963 = vsub.f32 %v29, %v962
    %v964 = vand.u32 %v963, 4294901760
    %965 = vmatpush1.msra.mxu0 %v964
    %966 = vmatprep.subr.mxu0 0.0
    %v967 = vand.u32 %v30, 4294901760
    %v968 = vsub.f32 %v30, %v967
    %v969 = vand.u32 %v968, 4294901760
    %970 = vmatpush1.msra.mxu0 %v969
    %971 = vmatprep.subr.mxu0 0.0
    %v972 = vand.u32 %v31, 4294901760
    %v973 = vsub.f32 %v31, %v972
    %v974 = vand.u32 %v973, 4294901760
    %975 = vmatpush1.msra.mxu0 %v974
    %976 = vmatprep.subr.mxu0 0.0
    %v977 = vand.u32 %v32, 4294901760
    %v978 = vsub.f32 %v32, %v977
    %v979 = vand.u32 %v978, 4294901760
    %980 = vmatpush1.msra.mxu0 %v979
    %981 = vmatprep.subr.mxu0 0.0
    %v982 = vand.u32 %v33, 4294901760
    %v983 = vsub.f32 %v33, %v982
    %v984 = vand.u32 %v983, 4294901760
    %985 = vmatpush1.msra.mxu0 %v984
    %986 = vmatprep.subr.mxu0 0.0
    %v987 = vand.u32 %v34, 4294901760
    %v988 = vsub.f32 %v34, %v987
    %v989 = vand.u32 %v988, 4294901760
    %990 = vmatpush1.msra.mxu0 %v989
    %991 = vmatprep.subr.mxu0 0.0
    %v992 = vand.u32 %v35, 4294901760
    %v993 = vsub.f32 %v35, %v992
    %v994 = vand.u32 %v993, 4294901760
    %995 = vmatpush1.msra.mxu0 %v994
    %996 = vmatprep.subr.mxu0 0.0
    %v997 = vand.u32 %v36, 4294901760
    %v998 = vsub.f32 %v36, %v997
    %v999 = vand.u32 %v998, 4294901760
    %1000 = vmatpush1.msra.mxu0 %v999
    %1001 = vmatprep.subr.mxu0 0.0
    %v1002 = vand.u32 %v37, 4294901760
    %v1003 = vsub.f32 %v37, %v1002
    %v1004 = vand.u32 %v1003, 4294901760
    %1005 = vmatpush1.msra.mxu0 %v1004
    %1006 = vmatprep.subr.mxu0 0.0
    %v1007 = vand.u32 %v38, 4294901760
    %v1008 = vsub.f32 %v38, %v1007
    %v1009 = vand.u32 %v1008, 4294901760
    %1010 = vmatpush1.msra.mxu0 %v1009
    %1011 = vmatprep.subr.mxu0 0.0
    %v1012 = vand.u32 %v39, 4294901760
    %v1013 = vsub.f32 %v39, %v1012
    %v1014 = vand.u32 %v1013, 4294901760
    %1015 = vmatpush1.msra.mxu0 %v1014
    %1016 = vmatprep.subr.mxu0 0.0
    %v1017 = vand.u32 %v40, 4294901760
    %v1018 = vsub.f32 %v40, %v1017
    %v1019 = vand.u32 %v1018, 4294901760
    %1020 = vmatpush1.msra.mxu0 %v1019
    %1021 = vmatprep.subr.mxu0 0.0
    %v1022 = vand.u32 %v41, 4294901760
    %v1023 = vsub.f32 %v41, %v1022
    %v1024 = vand.u32 %v1023, 4294901760
    %1025 = vmatpush1.msra.mxu0 %v1024
    %1026 = vmatprep.subr.mxu0 0.0
    %v1027 = vand.u32 %v42, 4294901760
    %v1028 = vsub.f32 %v42, %v1027
    %v1029 = vand.u32 %v1028, 4294901760
    %1030 = vmatpush1.msra.mxu0 %v1029
    %1031 = vmatprep.subr.mxu0 0.0
    %v1032 = vand.u32 %v43, 4294901760
    %v1033 = vsub.f32 %v43, %v1032
    %v1034 = vand.u32 %v1033, 4294901760
    %1035 = vmatpush1.msra.mxu0 %v1034
    %1036 = vmatprep.subr.mxu0 0.0
    %1037 = vmatpush1.msra.mxu0 0.0
    %1038 = vmatprep.subr.mxu0 0.0
    %1039 = vmatpush1.msra.mxu0 0.0
    %1040 = vmatprep.subr.mxu0 0.0
    %1041 = vmatpush1.msra.mxu0 0.0
    %1042 = vmatprep.subr.mxu0 0.0
    %1043 = vmatpush1.msra.mxu0 0.0
    %1044 = vmatprep.subr.mxu0 0.0
    %1045 = vmatpush1.msra.mxu0 0.0
    %1046 = vmatprep.subr.mxu0 0.0
    %1047 = vmatpush1.msra.mxu0 0.0
    %1048 = vmatprep.subr.mxu0 0.0
    %1049 = vmatpush1.msra.mxu0 0.0
    %1050 = vmatprep.subr.mxu0 0.0
    %1051 = vmatpush1.msra.mxu0 0.0
    %1052 = vmatprep.subr.mxu0 0.0
    %1053 = vmatpush1.msra.mxu0 0.0
    %1054 = vmatprep.subr.mxu0 0.0
    %1055 = vmatpush1.msra.mxu0 0.0
    %1056 = vmatprep.subr.mxu0 0.0
    %1057 = vmatpush1.msra.mxu0 0.0
    %1058 = vmatprep.subr.mxu0 0.0
    %1059 = vmatpush1.msra.mxu0 0.0
    %1060 = vmatprep.subr.mxu0 0.0
    %1061 = vmatpush1.msra.mxu0 0.0
    %1062 = vmatprep.subr.mxu0 0.0
    %1063 = vmatpush1.msra.mxu0 0.0
    %1064 = vmatprep.subr.mxu0 0.0
    %1065 = vmatpush1.msra.mxu0 0.0
    %1066 = vmatprep.subr.mxu0 0.0
    %1067 = vmatpush1.msra.mxu0 0.0
    %1068 = vmatprep.mubr.f32.mxu0 0.0
    %v1069 = vand.u32 %v516, 4294901760
    %1070 = vmatmul.mubr.f32.gmra.mrb[0].mxu0 %v1069
    %v1071 = vpop.f32.mrb[0].mxu0
    %v1072 = vadd.f32 %v953, %v1071
    %v1073 = vpop.f32.mrb[0].mxu0
    %1074 = vdwg.mxu0
    %1075 = vmatprep.subr.mxu0 0.0
    %v1076 = vand.u32 %v28, 4294901760
    %1077 = vmatpush1.msra.mxu0 %v1076
    %1078 = vmatprep.subr.mxu0 0.0
    %v1079 = vand.u32 %v29, 4294901760
    %1080 = vmatpush1.msra.mxu0 %v1079
    %1081 = vmatprep.subr.mxu0 0.0
    %v1082 = vand.u32 %v30, 4294901760
    %1083 = vmatpush1.msra.mxu0 %v1082
    %1084 = vmatprep.subr.mxu0 0.0
    %v1085 = vand.u32 %v31, 4294901760
    %1086 = vmatpush1.msra.mxu0 %v1085
    %1087 = vmatprep.subr.mxu0 0.0
    %v1088 = vand.u32 %v32, 4294901760
    %1089 = vmatpush1.msra.mxu0 %v1088
    %1090 = vmatprep.subr.mxu0 0.0
    %v1091 = vand.u32 %v33, 4294901760
    %1092 = vmatpush1.msra.mxu0 %v1091
    %1093 = vmatprep.subr.mxu0 0.0
    %v1094 = vand.u32 %v34, 4294901760
    %1095 = vmatpush1.msra.mxu0 %v1094
    %1096 = vmatprep.subr.mxu0 0.0
    %v1097 = vand.u32 %v35, 4294901760
    %1098 = vmatpush1.msra.mxu0 %v1097
    %1099 = vmatprep.subr.mxu0 0.0
    %v1100 = vand.u32 %v36, 4294901760
    %1101 = vmatpush1.msra.mxu0 %v1100
    %1102 = vmatprep.subr.mxu0 0.0
    %v1103 = vand.u32 %v37, 4294901760
    %1104 = vmatpush1.msra.mxu0 %v1103
    %1105 = vmatprep.subr.mxu0 0.0
    %v1106 = vand.u32 %v38, 4294901760
    %1107 = vmatpush1.msra.mxu0 %v1106
    %1108 = vmatprep.subr.mxu0 0.0
    %v1109 = vand.u32 %v39, 4294901760
    %1110 = vmatpush1.msra.mxu0 %v1109
    %1111 = vmatprep.subr.mxu0 0.0
    %v1112 = vand.u32 %v40, 4294901760
    %1113 = vmatpush1.msra.mxu0 %v1112
    %1114 = vmatprep.subr.mxu0 0.0
    %v1115 = vand.u32 %v41, 4294901760
    %1116 = vmatpush1.msra.mxu0 %v1115
    %1117 = vmatprep.subr.mxu0 0.0
    %v1118 = vand.u32 %v42, 4294901760
    %1119 = vmatpush1.msra.mxu0 %v1118
    %1120 = vmatprep.subr.mxu0 0.0
    %v1121 = vand.u32 %v43, 4294901760
    %1122 = vmatpush1.msra.mxu0 %v1121
    %1123 = vmatprep.subr.mxu0 0.0
    %1124 = vmatpush1.msra.mxu0 0.0
    %1125 = vmatprep.subr.mxu0 0.0
    %1126 = vmatpush1.msra.mxu0 0.0
    %1127 = vmatprep.subr.mxu0 0.0
    %1128 = vmatpush1.msra.mxu0 0.0
    %1129 = vmatprep.subr.mxu0 0.0
    %1130 = vmatpush1.msra.mxu0 0.0
    %1131 = vmatprep.subr.mxu0 0.0
    %1132 = vmatpush1.msra.mxu0 0.0
    %1133 = vmatprep.subr.mxu0 0.0
    %1134 = vmatpush1.msra.mxu0 0.0
    %1135 = vmatprep.subr.mxu0 0.0
    %1136 = vmatpush1.msra.mxu0 0.0
    %1137 = vmatprep.subr.mxu0 0.0
    %1138 = vmatpush1.msra.mxu0 0.0
    %1139 = vmatprep.subr.mxu0 0.0
    %1140 = vmatpush1.msra.mxu0 0.0
    %1141 = vmatprep.subr.mxu0 0.0
    %1142 = vmatpush1.msra.mxu0 0.0
    %1143 = vmatprep.subr.mxu0 0.0
    %1144 = vmatpush1.msra.mxu0 0.0
    %1145 = vmatprep.subr.mxu0 0.0
    %1146 = vmatpush1.msra.mxu0 0.0
    %1147 = vmatprep.subr.mxu0 0.0
    %1148 = vmatpush1.msra.mxu0 0.0
    %1149 = vmatprep.subr.mxu0 0.0
    %1150 = vmatpush1.msra.mxu0 0.0
    %1151 = vmatprep.subr.mxu0 0.0
    %1152 = vmatpush1.msra.mxu0 0.0
    %1153 = vmatprep.subr.mxu0 0.0
    %1154 = vmatpush1.msra.mxu0 0.0
    %1155 = vmatprep.mubr.f32.mxu0 0.0
    %v1156 = vand.u32 %v516, 4294901760
    %1157 = vmatmul.mubr.f32.gmra.mrb[0].mxu0 %v1156
    %v1158 = vpop.f32.mrb[0].mxu0
    %v1159 = vadd.f32 %v1072, %v1158
    %v1160 = vpop.f32.mrb[0].mxu0
    %1161 = vdwg.mxu0
    %v1162 = vmax.f32 %v1159, 0.0
    %v1163 = vlaneseq
    %v1164 = vshrl.u32 %v1163, 7
    %v1165 = vsub.s32 0, %v1164
    %v1166 = vrot.slane %v61, %v1165
    %1167 = vmatprep.subr.mxu0 0.0
    %v1168 = vand.u32 %v45, 4294901760
    %1169 = vmatpush1.msra.mxu0 %v1168
    %1170 = vmatprep.subr.mxu0 0.0
    %v1171 = vand.u32 %v46, 4294901760
    %1172 = vmatpush1.msra.mxu0 %v1171
    %1173 = vmatprep.subr.mxu0 0.0
    %v1174 = vand.u32 %v47, 4294901760
    %1175 = vmatpush1.msra.mxu0 %v1174
    %1176 = vmatprep.subr.mxu0 0.0
    %v1177 = vand.u32 %v48, 4294901760
    %1178 = vmatpush1.msra.mxu0 %v1177
    %1179 = vmatprep.subr.mxu0 0.0
    %v1180 = vand.u32 %v49, 4294901760
    %1181 = vmatpush1.msra.mxu0 %v1180
    %1182 = vmatprep.subr.mxu0 0.0
    %v1183 = vand.u32 %v50, 4294901760
    %1184 = vmatpush1.msra.mxu0 %v1183
    %1185 = vmatprep.subr.mxu0 0.0
    %v1186 = vand.u32 %v51, 4294901760
    %1187 = vmatpush1.msra.mxu0 %v1186
    %1188 = vmatprep.subr.mxu0 0.0
    %v1189 = vand.u32 %v52, 4294901760
    %1190 = vmatpush1.msra.mxu0 %v1189
    %1191 = vmatprep.subr.mxu0 0.0
    %v1192 = vand.u32 %v53, 4294901760
    %1193 = vmatpush1.msra.mxu0 %v1192
    %1194 = vmatprep.subr.mxu0 0.0
    %v1195 = vand.u32 %v54, 4294901760
    %1196 = vmatpush1.msra.mxu0 %v1195
    %1197 = vmatprep.subr.mxu0 0.0
    %v1198 = vand.u32 %v55, 4294901760
    %1199 = vmatpush1.msra.mxu0 %v1198
    %1200 = vmatprep.subr.mxu0 0.0
    %v1201 = vand.u32 %v56, 4294901760
    %1202 = vmatpush1.msra.mxu0 %v1201
    %1203 = vmatprep.subr.mxu0 0.0
    %v1204 = vand.u32 %v57, 4294901760
    %1205 = vmatpush1.msra.mxu0 %v1204
    %1206 = vmatprep.subr.mxu0 0.0
    %v1207 = vand.u32 %v58, 4294901760
    %1208 = vmatpush1.msra.mxu0 %v1207
    %1209 = vmatprep.subr.mxu0 0.0
    %v1210 = vand.u32 %v59, 4294901760
    %1211 = vmatpush1.msra.mxu0 %v1210
    %1212 = vmatprep.subr.mxu0 0.0
    %v1213 = vand.u32 %v60, 4294901760
    %1214 = vmatpush1.msra.mxu0 %v1213
    %1215 = vmatprep.subr.mxu0 0.0
    %1216 = vmatpush1.msra.mxu0 0.0
    %1217 = vmatprep.subr.mxu0 0.0
    %1218 = vmatpush1.msra.mxu0 0.0
    %1219 = vmatprep.subr.mxu0 0.0
    %1220 = vmatpush1.msra.mxu0 0.0
    %1221 = vmatprep.subr.mxu0 0.0
    %1222 = vmatpush1.msra.mxu0 0.0
    %1223 = vmatprep.subr.mxu0 0.0
    %1224 = vmatpush1.msra.mxu0 0.0
    %1225 = vmatprep.subr.mxu0 0.0
    %1226 = vmatpush1.msra.mxu0 0.0
    %1227 = vmatprep.subr.mxu0 0.0
    %1228 = vmatpush1.msra.mxu0 0.0
    %1229 = vmatprep.subr.mxu0 0.0
    %1230 = vmatpush1.msra.mxu0 0.0
    %1231 = vmatprep.subr.mxu0 0.0
    %1232 = vmatpush1.msra.mxu0 0.0
    %1233 = vmatprep.subr.mxu0 0.0
    %1234 = vmatpush1.msra.mxu0 0.0
    %1235 = vmatprep.subr.mxu0 0.0
    %1236 = vmatpush1.msra.mxu0 0.0
    %1237 = vmatprep.subr.mxu0 0.0
    %1238 = vmatpush1.msra.mxu0 0.0
    %1239 = vmatprep.subr.mxu0 0.0
    %1240 = vmatpush1.msra.mxu0 0.0
    %1241 = vmatprep.subr.mxu0 0.0
    %1242 = vmatpush1.msra.mxu0 0.0
    %1243 = vmatprep.subr.mxu0 0.0
    %1244 = vmatpush1.msra.mxu0 0.0
    %1245 = vmatprep.subr.mxu0 0.0
    %1246 = vmatpush1.msra.mxu0 0.0
    %1247 = vmatprep.mubr.f32.mxu0 0.0
    %v1248 = vand.u32 %v1162, 4294901760
    %v1249 = vsub.f32 %v1162, %v1248
    %v1250 = vand.u32 %v1249, 4294901760
    %v1251 = vsub.f32 %v1249, %v1250
    %v1252 = vand.u32 %v1251, 4294901760
    %1253 = vmatmul.mubr.f32.gmra.mrb[0].mxu0 %v1252
    %v1254 = vpop.f32.mrb[0].mxu0
    %v1255 = vadd.f32 %v1166, %v1254
    %v1256 = vpop.f32.mrb[0].mxu0
    %1257 = vdwg.mxu0
    %1258 = vmatprep.subr.mxu0 0.0
    %v1259 = vand.u32 %v45, 4294901760
    %v1260 = vsub.f32 %v45, %v1259
    %v1261 = vand.u32 %v1260, 4294901760
    %v1262 = vsub.f32 %v1260, %v1261
    %v1263 = vand.u32 %v1262, 4294901760
    %1264 = vmatpush1.msra.mxu0 %v1263
    %1265 = vmatprep.subr.mxu0 0.0
    %v1266 = vand.u32 %v46, 4294901760
    %v1267 = vsub.f32 %v46, %v1266
    %v1268 = vand.u32 %v1267, 4294901760
    %v1269 = vsub.f32 %v1267, %v1268
    %v1270 = vand.u32 %v1269, 4294901760
    %1271 = vmatpush1.msra.mxu0 %v1270
    %1272 = vmatprep.subr.mxu0 0.0
    %v1273 = vand.u32 %v47, 4294901760
    %v1274 = vsub.f32 %v47, %v1273
    %v1275 = vand.u32 %v1274, 4294901760
    %v1276 = vsub.f32 %v1274, %v1275
    %v1277 = vand.u32 %v1276, 4294901760
    %1278 = vmatpush1.msra.mxu0 %v1277
    %1279 = vmatprep.subr.mxu0 0.0
    %v1280 = vand.u32 %v48, 4294901760
    %v1281 = vsub.f32 %v48, %v1280
    %v1282 = vand.u32 %v1281, 4294901760
    %v1283 = vsub.f32 %v1281, %v1282
    %v1284 = vand.u32 %v1283, 4294901760
    %1285 = vmatpush1.msra.mxu0 %v1284
    %1286 = vmatprep.subr.mxu0 0.0
    %v1287 = vand.u32 %v49, 4294901760
    %v1288 = vsub.f32 %v49, %v1287
    %v1289 = vand.u32 %v1288, 4294901760
    %v1290 = vsub.f32 %v1288, %v1289
    %v1291 = vand.u32 %v1290, 4294901760
    %1292 = vmatpush1.msra.mxu0 %v1291
    %1293 = vmatprep.subr.mxu0 0.0
    %v1294 = vand.u32 %v50, 4294901760
    %v1295 = vsub.f32 %v50, %v1294
    %v1296 = vand.u32 %v1295, 4294901760
    %v1297 = vsub.f32 %v1295, %v1296
    %v1298 = vand.u32 %v1297, 4294901760
    %1299 = vmatpush1.msra.mxu0 %v1298
    %1300 = vmatprep.subr.mxu0 0.0
    %v1301 = vand.u32 %v51, 4294901760
    %v1302 = vsub.f32 %v51, %v1301
    %v1303 = vand.u32 %v1302, 4294901760
    %v1304 = vsub.f32 %v1302, %v1303
    %v1305 = vand.u32 %v1304, 4294901760
    %1306 = vmatpush1.msra.mxu0 %v1305
    %1307 = vmatprep.subr.mxu0 0.0
    %v1308 = vand.u32 %v52, 4294901760
    %v1309 = vsub.f32 %v52, %v1308
    %v1310 = vand.u32 %v1309, 4294901760
    %v1311 = vsub.f32 %v1309, %v1310
    %v1312 = vand.u32 %v1311, 4294901760
    %1313 = vmatpush1.msra.mxu0 %v1312
    %1314 = vmatprep.subr.mxu0 0.0
    %v1315 = vand.u32 %v53, 4294901760
    %v1316 = vsub.f32 %v53, %v1315
    %v1317 = vand.u32 %v1316, 4294901760
    %v1318 = vsub.f32 %v1316, %v1317
    %v1319 = vand.u32 %v1318, 4294901760
    %1320 = vmatpush1.msra.mxu0 %v1319
    %1321 = vmatprep.subr.mxu0 0.0
    %v1322 = vand.u32 %v54, 4294901760
    %v1323 = vsub.f32 %v54, %v1322
    %v1324 = vand.u32 %v1323, 4294901760
    %v1325 = vsub.f32 %v1323, %v1324
    %v1326 = vand.u32 %v1325, 4294901760
    %1327 = vmatpush1.msra.mxu0 %v1326
    %1328 = vmatprep.subr.mxu0 0.0
    %v1329 = vand.u32 %v55, 4294901760
    %v1330 = vsub.f32 %v55, %v1329
    %v1331 = vand.u32 %v1330, 4294901760
    %v1332 = vsub.f32 %v1330, %v1331
    %v1333 = vand.u32 %v1332, 4294901760
    %1334 = vmatpush1.msra.mxu0 %v1333
    %1335 = vmatprep.subr.mxu0 0.0
    %v1336 = vand.u32 %v56, 4294901760
    %v1337 = vsub.f32 %v56, %v1336
    %v1338 = vand.u32 %v1337, 4294901760
    %v1339 = vsub.f32 %v1337, %v1338
    %v1340 = vand.u32 %v1339, 4294901760
    %1341 = vmatpush1.msra.mxu0 %v1340
    %1342 = vmatprep.subr.mxu0 0.0
    %v1343 = vand.u32 %v57, 4294901760
    %v1344 = vsub.f32 %v57, %v1343
    %v1345 = vand.u32 %v1344, 4294901760
    %v1346 = vsub.f32 %v1344, %v1345
    %v1347 = vand.u32 %v1346, 4294901760
    %1348 = vmatpush1.msra.mxu0 %v1347
    %1349 = vmatprep.subr.mxu0 0.0
    %v1350 = vand.u32 %v58, 4294901760
    %v1351 = vsub.f32 %v58, %v1350
    %v1352 = vand.u32 %v1351, 4294901760
    %v1353 = vsub.f32 %v1351, %v1352
    %v1354 = vand.u32 %v1353, 4294901760
    %1355 = vmatpush1.msra.mxu0 %v1354
    %1356 = vmatprep.subr.mxu0 0.0
    %v1357 = vand.u32 %v59, 4294901760
    %v1358 = vsub.f32 %v59, %v1357
    %v1359 = vand.u32 %v1358, 4294901760
    %v1360 = vsub.f32 %v1358, %v1359
    %v1361 = vand.u32 %v1360, 4294901760
    %1362 = vmatpush1.msra.mxu0 %v1361
    %1363 = vmatprep.subr.mxu0 0.0
    %v1364 = vand.u32 %v60, 4294901760
    %v1365 = vsub.f32 %v60, %v1364
    %v1366 = vand.u32 %v1365, 4294901760
    %v1367 = vsub.f32 %v1365, %v1366
    %v1368 = vand.u32 %v1367, 4294901760
    %1369 = vmatpush1.msra.mxu0 %v1368
    %1370 = vmatprep.subr.mxu0 0.0
    %1371 = vmatpush1.msra.mxu0 0.0
    %1372 = vmatprep.subr.mxu0 0.0
    %1373 = vmatpush1.msra.mxu0 0.0
    %1374 = vmatprep.subr.mxu0 0.0
    %1375 = vmatpush1.msra.mxu0 0.0
    %1376 = vmatprep.subr.mxu0 0.0
    %1377 = vmatpush1.msra.mxu0 0.0
    %1378 = vmatprep.subr.mxu0 0.0
    %1379 = vmatpush1.msra.mxu0 0.0
    %1380 = vmatprep.subr.mxu0 0.0
    %1381 = vmatpush1.msra.mxu0 0.0
    %1382 = vmatprep.subr.mxu0 0.0
    %1383 = vmatpush1.msra.mxu0 0.0
    %1384 = vmatprep.subr.mxu0 0.0
    %1385 = vmatpush1.msra.mxu0 0.0
    %1386 = vmatprep.subr.mxu0 0.0
    %1387 = vmatpush1.msra.mxu0 0.0
    %1388 = vmatprep.subr.mxu0 0.0
    %1389 = vmatpush1.msra.mxu0 0.0
    %1390 = vmatprep.subr.mxu0 0.0
    %1391 = vmatpush1.msra.mxu0 0.0
    %1392 = vmatprep.subr.mxu0 0.0
    %1393 = vmatpush1.msra.mxu0 0.0
    %1394 = vmatprep.subr.mxu0 0.0
    %1395 = vmatpush1.msra.mxu0 0.0
    %1396 = vmatprep.subr.mxu0 0.0
    %1397 = vmatpush1.msra.mxu0 0.0
    %1398 = vmatprep.subr.mxu0 0.0
    %1399 = vmatpush1.msra.mxu0 0.0
    %1400 = vmatprep.subr.mxu0 0.0
    %1401 = vmatpush1.msra.mxu0 0.0
    %1402 = vmatprep.mubr.f32.mxu0 0.0
    %v1403 = vand.u32 %v1162, 4294901760
    %1404 = vmatmul.mubr.f32.gmra.mrb[0].mxu0 %v1403
    %v1405 = vpop.f32.mrb[0].mxu0
    %v1406 = vadd.f32 %v1255, %v1405
    %v1407 = vpop.f32.mrb[0].mxu0
    %1408 = vdwg.mxu0
    %1409 = vmatprep.subr.mxu0 0.0
    %v1410 = vand.u32 %v45, 4294901760
    %v1411 = vsub.f32 %v45, %v1410
    %1412 = vmatpush1.msra.mxu0 %v1411
    %1413 = vmatprep.subr.mxu0 0.0
    %v1414 = vand.u32 %v46, 4294901760
    %v1415 = vsub.f32 %v46, %v1414
    %1416 = vmatpush1.msra.mxu0 %v1415
    %1417 = vmatprep.subr.mxu0 0.0
    %v1418 = vand.u32 %v47, 4294901760
    %v1419 = vsub.f32 %v47, %v1418
    %1420 = vmatpush1.msra.mxu0 %v1419
    %1421 = vmatprep.subr.mxu0 0.0
    %v1422 = vand.u32 %v48, 4294901760
    %v1423 = vsub.f32 %v48, %v1422
    %1424 = vmatpush1.msra.mxu0 %v1423
    %1425 = vmatprep.subr.mxu0 0.0
    %v1426 = vand.u32 %v49, 4294901760
    %v1427 = vsub.f32 %v49, %v1426
    %1428 = vmatpush1.msra.mxu0 %v1427
    %1429 = vmatprep.subr.mxu0 0.0
    %v1430 = vand.u32 %v50, 4294901760
    %v1431 = vsub.f32 %v50, %v1430
    %1432 = vmatpush1.msra.mxu0 %v1431
    %1433 = vmatprep.subr.mxu0 0.0
    %v1434 = vand.u32 %v51, 4294901760
    %v1435 = vsub.f32 %v51, %v1434
    %1436 = vmatpush1.msra.mxu0 %v1435
    %1437 = vmatprep.subr.mxu0 0.0
    %v1438 = vand.u32 %v52, 4294901760
    %v1439 = vsub.f32 %v52, %v1438
    %1440 = vmatpush1.msra.mxu0 %v1439
    %1441 = vmatprep.subr.mxu0 0.0
    %v1442 = vand.u32 %v53, 4294901760
    %v1443 = vsub.f32 %v53, %v1442
    %1444 = vmatpush1.msra.mxu0 %v1443
    %1445 = vmatprep.subr.mxu0 0.0
    %v1446 = vand.u32 %v54, 4294901760
    %v1447 = vsub.f32 %v54, %v1446
    %1448 = vmatpush1.msra.mxu0 %v1447
    %1449 = vmatprep.subr.mxu0 0.0
    %v1450 = vand.u32 %v55, 4294901760
    %v1451 = vsub.f32 %v55, %v1450
    %1452 = vmatpush1.msra.mxu0 %v1451
    %1453 = vmatprep.subr.mxu0 0.0
    %v1454 = vand.u32 %v56, 4294901760
    %v1455 = vsub.f32 %v56, %v1454
    %1456 = vmatpush1.msra.mxu0 %v1455
    %1457 = vmatprep.subr.mxu0 0.0
    %v1458 = vand.u32 %v57, 4294901760
    %v1459 = vsub.f32 %v57, %v1458
    %1460 = vmatpush1.msra.mxu0 %v1459
    %1461 = vmatprep.subr.mxu0 0.0
    %v1462 = vand.u32 %v58, 4294901760
    %v1463 = vsub.f32 %v58, %v1462
    %1464 = vmatpush1.msra.mxu0 %v1463
    %1465 = vmatprep.subr.mxu0 0.0
    %v1466 = vand.u32 %v59, 4294901760
    %v1467 = vsub.f32 %v59, %v1466
    %1468 = vmatpush1.msra.mxu0 %v1467
    %1469 = vmatprep.subr.mxu0 0.0
    %v1470 = vand.u32 %v60, 4294901760
    %v1471 = vsub.f32 %v60, %v1470
    %1472 = vmatpush1.msra.mxu0 %v1471
    %1473 = vmatprep.subr.mxu0 0.0
    %1474 = vmatpush1.msra.mxu0 0.0
    %1475 = vmatprep.subr.mxu0 0.0
    %1476 = vmatpush1.msra.mxu0 0.0
    %1477 = vmatprep.subr.mxu0 0.0
    %1478 = vmatpush1.msra.mxu0 0.0
    %1479 = vmatprep.subr.mxu0 0.0
    %1480 = vmatpush1.msra.mxu0 0.0
    %1481 = vmatprep.subr.mxu0 0.0
    %1482 = vmatpush1.msra.mxu0 0.0
    %1483 = vmatprep.subr.mxu0 0.0
    %1484 = vmatpush1.msra.mxu0 0.0
    %1485 = vmatprep.subr.mxu0 0.0
    %1486 = vmatpush1.msra.mxu0 0.0
    %1487 = vmatprep.subr.mxu0 0.0
    %1488 = vmatpush1.msra.mxu0 0.0
    %1489 = vmatprep.subr.mxu0 0.0
    %1490 = vmatpush1.msra.mxu0 0.0
    %1491 = vmatprep.subr.mxu0 0.0
    %1492 = vmatpush1.msra.mxu0 0.0
    %1493 = vmatprep.subr.mxu0 0.0
    %1494 = vmatpush1.msra.mxu0 0.0
    %1495 = vmatprep.subr.mxu0 0.0
    %1496 = vmatpush1.msra.mxu0 0.0
    %1497 = vmatprep.subr.mxu0 0.0
    %1498 = vmatpush1.msra.mxu0 0.0
    %1499 = vmatprep.subr.mxu0 0.0
    %1500 = vmatpush1.msra.mxu0 0.0
    %1501 = vmatprep.subr.mxu0 0.0
    %1502 = vmatpush1.msra.mxu0 0.0
    %1503 = vmatprep.subr.mxu0 0.0
    %1504 = vmatpush1.msra.mxu0 0.0
    %1505 = vmatprep.mubr.f32.mxu0 0.0
    %v1506 = vand.u32 %v1162, 4294901760
    %v1507 = vsub.f32 %v1162, %v1506
    %1508 = vmatmul.mubr.f32.gmra.mrb[0].mxu0 %v1507
    %v1509 = vpop.f32.mrb[0].mxu0
    %v1510 = vadd.f32 %v1406, %v1509
    %v1511 = vpop.f32.mrb[0].mxu0
    %1512 = vdwg.mxu0
    %1513 = vmatprep.subr.mxu0 0.0
    %v1514 = vand.u32 %v45, 4294901760
    %1515 = vmatpush1.msra.mxu0 %v1514
    %1516 = vmatprep.subr.mxu0 0.0
    %v1517 = vand.u32 %v46, 4294901760
    %1518 = vmatpush1.msra.mxu0 %v1517
    %1519 = vmatprep.subr.mxu0 0.0
    %v1520 = vand.u32 %v47, 4294901760
    %1521 = vmatpush1.msra.mxu0 %v1520
    %1522 = vmatprep.subr.mxu0 0.0
    %v1523 = vand.u32 %v48, 4294901760
    %1524 = vmatpush1.msra.mxu0 %v1523
    %1525 = vmatprep.subr.mxu0 0.0
    %v1526 = vand.u32 %v49, 4294901760
    %1527 = vmatpush1.msra.mxu0 %v1526
    %1528 = vmatprep.subr.mxu0 0.0
    %v1529 = vand.u32 %v50, 4294901760
    %1530 = vmatpush1.msra.mxu0 %v1529
    %1531 = vmatprep.subr.mxu0 0.0
    %v1532 = vand.u32 %v51, 4294901760
    %1533 = vmatpush1.msra.mxu0 %v1532
    %1534 = vmatprep.subr.mxu0 0.0
    %v1535 = vand.u32 %v52, 4294901760
    %1536 = vmatpush1.msra.mxu0 %v1535
    %1537 = vmatprep.subr.mxu0 0.0
    %v1538 = vand.u32 %v53, 4294901760
    %1539 = vmatpush1.msra.mxu0 %v1538
    %1540 = vmatprep.subr.mxu0 0.0
    %v1541 = vand.u32 %v54, 4294901760
    %1542 = vmatpush1.msra.mxu0 %v1541
    %1543 = vmatprep.subr.mxu0 0.0
    %v1544 = vand.u32 %v55, 4294901760
    %1545 = vmatpush1.msra.mxu0 %v1544
    %1546 = vmatprep.subr.mxu0 0.0
    %v1547 = vand.u32 %v56, 4294901760
    %1548 = vmatpush1.msra.mxu0 %v1547
    %1549 = vmatprep.subr.mxu0 0.0
    %v1550 = vand.u32 %v57, 4294901760
    %1551 = vmatpush1.msra.mxu0 %v1550
    %1552 = vmatprep.subr.mxu0 0.0
    %v1553 = vand.u32 %v58, 4294901760
    %1554 = vmatpush1.msra.mxu0 %v1553
    %1555 = vmatprep.subr.mxu0 0.0
    %v1556 = vand.u32 %v59, 4294901760
    %1557 = vmatpush1.msra.mxu0 %v1556
    %1558 = vmatprep.subr.mxu0 0.0
    %v1559 = vand.u32 %v60, 4294901760
    %1560 = vmatpush1.msra.mxu0 %v1559
    %1561 = vmatprep.subr.mxu0 0.0
    %1562 = vmatpush1.msra.mxu0 0.0
    %1563 = vmatprep.subr.mxu0 0.0
    %1564 = vmatpush1.msra.mxu0 0.0
    %1565 = vmatprep.subr.mxu0 0.0
    %1566 = vmatpush1.msra.mxu0 0.0
    %1567 = vmatprep.subr.mxu0 0.0
    %1568 = vmatpush1.msra.mxu0 0.0
    %1569 = vmatprep.subr.mxu0 0.0
    %1570 = vmatpush1.msra.mxu0 0.0
    %1571 = vmatprep.subr.mxu0 0.0
    %1572 = vmatpush1.msra.mxu0 0.0
    %1573 = vmatprep.subr.mxu0 0.0
    %1574 = vmatpush1.msra.mxu0 0.0
    %1575 = vmatprep.subr.mxu0 0.0
    %1576 = vmatpush1.msra.mxu0 0.0
    %1577 = vmatprep.subr.mxu0 0.0
    %1578 = vmatpush1.msra.mxu0 0.0
    %1579 = vmatprep.subr.mxu0 0.0
    %1580 = vmatpush1.msra.mxu0 0.0
    %1581 = vmatprep.subr.mxu0 0.0
    %1582 = vmatpush1.msra.mxu0 0.0
    %1583 = vmatprep.subr.mxu0 0.0
    %1584 = vmatpush1.msra.mxu0 0.0
    %1585 = vmatprep.subr.mxu0 0.0
    %1586 = vmatpush1.msra.mxu0 0.0
    %1587 = vmatprep.subr.mxu0 0.0
    %1588 = vmatpush1.msra.mxu0 0.0
    %1589 = vmatprep.subr.mxu0 0.0
    %1590 = vmatpush1.msra.mxu0 0.0
    %1591 = vmatprep.subr.mxu0 0.0
    %1592 = vmatpush1.msra.mxu0 0.0
    %1593 = vmatprep.mubr.f32.mxu0 0.0
    %v1594 = vand.u32 %v1162, 4294901760
    %v1595 = vsub.f32 %v1162, %v1594
    %v1596 = vand.u32 %v1595, 4294901760
    %1597 = vmatmul.mubr.f32.gmra.mrb[0].mxu0 %v1596
    %v1598 = vpop.f32.mrb[0].mxu0
    %v1599 = vadd.f32 %v1510, %v1598
    %v1600 = vpop.f32.mrb[0].mxu0
    %1601 = vdwg.mxu0
    %1602 = vmatprep.subr.mxu0 0.0
    %v1603 = vand.u32 %v45, 4294901760
    %v1604 = vsub.f32 %v45, %v1603
    %v1605 = vand.u32 %v1604, 4294901760
    %1606 = vmatpush1.msra.mxu0 %v1605
    %1607 = vmatprep.subr.mxu0 0.0
    %v1608 = vand.u32 %v46, 4294901760
    %v1609 = vsub.f32 %v46, %v1608
    %v1610 = vand.u32 %v1609, 4294901760
    %1611 = vmatpush1.msra.mxu0 %v1610
    %1612 = vmatprep.subr.mxu0 0.0
    %v1613 = vand.u32 %v47, 4294901760
    %v1614 = vsub.f32 %v47, %v1613
    %v1615 = vand.u32 %v1614, 4294901760
    %1616 = vmatpush1.msra.mxu0 %v1615
    %1617 = vmatprep.subr.mxu0 0.0
    %v1618 = vand.u32 %v48, 4294901760
    %v1619 = vsub.f32 %v48, %v1618
    %v1620 = vand.u32 %v1619, 4294901760
    %1621 = vmatpush1.msra.mxu0 %v1620
    %1622 = vmatprep.subr.mxu0 0.0
    %v1623 = vand.u32 %v49, 4294901760
    %v1624 = vsub.f32 %v49, %v1623
    %v1625 = vand.u32 %v1624, 4294901760
    %1626 = vmatpush1.msra.mxu0 %v1625
    %1627 = vmatprep.subr.mxu0 0.0
    %v1628 = vand.u32 %v50, 4294901760
    %v1629 = vsub.f32 %v50, %v1628
    %v1630 = vand.u32 %v1629, 4294901760
    %1631 = vmatpush1.msra.mxu0 %v1630
    %1632 = vmatprep.subr.mxu0 0.0
    %v1633 = vand.u32 %v51, 4294901760
    %v1634 = vsub.f32 %v51, %v1633
    %v1635 = vand.u32 %v1634, 4294901760
    %1636 = vmatpush1.msra.mxu0 %v1635
    %1637 = vmatprep.subr.mxu0 0.0
    %v1638 = vand.u32 %v52, 4294901760
    %v1639 = vsub.f32 %v52, %v1638
    %v1640 = vand.u32 %v1639, 4294901760
    %1641 = vmatpush1.msra.mxu0 %v1640
    %1642 = vmatprep.subr.mxu0 0.0
    %v1643 = vand.u32 %v53, 4294901760
    %v1644 = vsub.f32 %v53, %v1643
    %v1645 = vand.u32 %v1644, 4294901760
    %1646 = vmatpush1.msra.mxu0 %v1645
    %1647 = vmatprep.subr.mxu0 0.0
    %v1648 = vand.u32 %v54, 4294901760
    %v1649 = vsub.f32 %v54, %v1648
    %v1650 = vand.u32 %v1649, 4294901760
    %1651 = vmatpush1.msra.mxu0 %v1650
    %1652 = vmatprep.subr.mxu0 0.0
    %v1653 = vand.u32 %v55, 4294901760
    %v1654 = vsub.f32 %v55, %v1653
    %v1655 = vand.u32 %v1654, 4294901760
    %1656 = vmatpush1.msra.mxu0 %v1655
    %1657 = vmatprep.subr.mxu0 0.0
    %v1658 = vand.u32 %v56, 4294901760
    %v1659 = vsub.f32 %v56, %v1658
    %v1660 = vand.u32 %v1659, 4294901760
    %1661 = vmatpush1.msra.mxu0 %v1660
    %1662 = vmatprep.subr.mxu0 0.0
    %v1663 = vand.u32 %v57, 4294901760
    %v1664 = vsub.f32 %v57, %v1663
    %v1665 = vand.u32 %v1664, 4294901760
    %1666 = vmatpush1.msra.mxu0 %v1665
    %1667 = vmatprep.subr.mxu0 0.0
    %v1668 = vand.u32 %v58, 4294901760
    %v1669 = vsub.f32 %v58, %v1668
    %v1670 = vand.u32 %v1669, 4294901760
    %1671 = vmatpush1.msra.mxu0 %v1670
    %1672 = vmatprep.subr.mxu0 0.0
    %v1673 = vand.u32 %v59, 4294901760
    %v1674 = vsub.f32 %v59, %v1673
    %v1675 = vand.u32 %v1674, 4294901760
    %1676 = vmatpush1.msra.mxu0 %v1675
    %1677 = vmatprep.subr.mxu0 0.0
    %v1678 = vand.u32 %v60, 4294901760
    %v1679 = vsub.f32 %v60, %v1678
    %v1680 = vand.u32 %v1679, 4294901760
    %1681 = vmatpush1.msra.mxu0 %v1680
    %1682 = vmatprep.subr.mxu0 0.0
    %1683 = vmatpush1.msra.mxu0 0.0
    %1684 = vmatprep.subr.mxu0 0.0
    %1685 = vmatpush1.msra.mxu0 0.0
    %1686 = vmatprep.subr.mxu0 0.0
    %1687 = vmatpush1.msra.mxu0 0.0
    %1688 = vmatprep.subr.mxu0 0.0
    %1689 = vmatpush1.msra.mxu0 0.0
    %1690 = vmatprep.subr.mxu0 0.0
    %1691 = vmatpush1.msra.mxu0 0.0
    %1692 = vmatprep.subr.mxu0 0.0
    %1693 = vmatpush1.msra.mxu0 0.0
    %1694 = vmatprep.subr.mxu0 0.0
    %1695 = vmatpush1.msra.mxu0 0.0
    %1696 = vmatprep.subr.mxu0 0.0
    %1697 = vmatpush1.msra.mxu0 0.0
    %1698 = vmatprep.subr.mxu0 0.0
    %1699 = vmatpush1.msra.mxu0 0.0
    %1700 = vmatprep.subr.mxu0 0.0
    %1701 = vmatpush1.msra.mxu0 0.0
    %1702 = vmatprep.subr.mxu0 0.0
    %1703 = vmatpush1.msra.mxu0 0.0
    %1704 = vmatprep.subr.mxu0 0.0
    %1705 = vmatpush1.msra.mxu0 0.0
    %1706 = vmatprep.subr.mxu0 0.0
    %1707 = vmatpush1.msra.mxu0 0.0
    %1708 = vmatprep.subr.mxu0 0.0
    %1709 = vmatpush1.msra.mxu0 0.0
    %1710 = vmatprep.subr.mxu0 0.0
    %1711 = vmatpush1.msra.mxu0 0.0
    %1712 = vmatprep.subr.mxu0 0.0
    %1713 = vmatpush1.msra.mxu0 0.0
    %1714 = vmatprep.mubr.f32.mxu0 0.0
    %v1715 = vand.u32 %v1162, 4294901760
    %1716 = vmatmul.mubr.f32.gmra.mrb[0].mxu0 %v1715
    %v1717 = vpop.f32.mrb[0].mxu0
    %v1718 = vadd.f32 %v1599, %v1717
    %v1719 = vpop.f32.mrb[0].mxu0
    %1720 = vdwg.mxu0
    %1721 = vmatprep.subr.mxu0 0.0
    %v1722 = vand.u32 %v45, 4294901760
    %1723 = vmatpush1.msra.mxu0 %v1722
    %1724 = vmatprep.subr.mxu0 0.0
    %v1725 = vand.u32 %v46, 4294901760
    %1726 = vmatpush1.msra.mxu0 %v1725
    %1727 = vmatprep.subr.mxu0 0.0
    %v1728 = vand.u32 %v47, 4294901760
    %1729 = vmatpush1.msra.mxu0 %v1728
    %1730 = vmatprep.subr.mxu0 0.0
    %v1731 = vand.u32 %v48, 4294901760
    %1732 = vmatpush1.msra.mxu0 %v1731
    %1733 = vmatprep.subr.mxu0 0.0
    %v1734 = vand.u32 %v49, 4294901760
    %1735 = vmatpush1.msra.mxu0 %v1734
    %1736 = vmatprep.subr.mxu0 0.0
    %v1737 = vand.u32 %v50, 4294901760
    %1738 = vmatpush1.msra.mxu0 %v1737
    %1739 = vmatprep.subr.mxu0 0.0
    %v1740 = vand.u32 %v51, 4294901760
    %1741 = vmatpush1.msra.mxu0 %v1740
    %1742 = vmatprep.subr.mxu0 0.0
    %v1743 = vand.u32 %v52, 4294901760
    %1744 = vmatpush1.msra.mxu0 %v1743
    %1745 = vmatprep.subr.mxu0 0.0
    %v1746 = vand.u32 %v53, 4294901760
    %1747 = vmatpush1.msra.mxu0 %v1746
    %1748 = vmatprep.subr.mxu0 0.0
    %v1749 = vand.u32 %v54, 4294901760
    %1750 = vmatpush1.msra.mxu0 %v1749
    %1751 = vmatprep.subr.mxu0 0.0
    %v1752 = vand.u32 %v55, 4294901760
    %1753 = vmatpush1.msra.mxu0 %v1752
    %1754 = vmatprep.subr.mxu0 0.0
    %v1755 = vand.u32 %v56, 4294901760
    %1756 = vmatpush1.msra.mxu0 %v1755
    %1757 = vmatprep.subr.mxu0 0.0
    %v1758 = vand.u32 %v57, 4294901760
    %1759 = vmatpush1.msra.mxu0 %v1758
    %1760 = vmatprep.subr.mxu0 0.0
    %v1761 = vand.u32 %v58, 4294901760
    %1762 = vmatpush1.msra.mxu0 %v1761
    %1763 = vmatprep.subr.mxu0 0.0
    %v1764 = vand.u32 %v59, 4294901760
    %1765 = vmatpush1.msra.mxu0 %v1764
    %1766 = vmatprep.subr.mxu0 0.0
    %v1767 = vand.u32 %v60, 4294901760
    %1768 = vmatpush1.msra.mxu0 %v1767
    %1769 = vmatprep.subr.mxu0 0.0
    %1770 = vmatpush1.msra.mxu0 0.0
    %1771 = vmatprep.subr.mxu0 0.0
    %1772 = vmatpush1.msra.mxu0 0.0
    %1773 = vmatprep.subr.mxu0 0.0
    %1774 = vmatpush1.msra.mxu0 0.0
    %1775 = vmatprep.subr.mxu0 0.0
    %1776 = vmatpush1.msra.mxu0 0.0
    %1777 = vmatprep.subr.mxu0 0.0
    %1778 = vmatpush1.msra.mxu0 0.0
    %1779 = vmatprep.subr.mxu0 0.0
    %1780 = vmatpush1.msra.mxu0 0.0
    %1781 = vmatprep.subr.mxu0 0.0
    %1782 = vmatpush1.msra.mxu0 0.0
    %1783 = vmatprep.subr.mxu0 0.0
    %1784 = vmatpush1.msra.mxu0 0.0
    %1785 = vmatprep.subr.mxu0 0.0
    %1786 = vmatpush1.msra.mxu0 0.0
    %1787 = vmatprep.subr.mxu0 0.0
    %1788 = vmatpush1.msra.mxu0 0.0
    %1789 = vmatprep.subr.mxu0 0.0
    %1790 = vmatpush1.msra.mxu0 0.0
    %1791 = vmatprep.subr.mxu0 0.0
    %1792 = vmatpush1.msra.mxu0 0.0
    %1793 = vmatprep.subr.mxu0 0.0
    %1794 = vmatpush1.msra.mxu0 0.0
    %1795 = vmatprep.subr.mxu0 0.0
    %1796 = vmatpush1.msra.mxu0 0.0
    %1797 = vmatprep.subr.mxu0 0.0
    %1798 = vmatpush1.msra.mxu0 0.0
    %1799 = vmatprep.subr.mxu0 0.0
    %1800 = vmatpush1.msra.mxu0 0.0
    %1801 = vmatprep.mubr.f32.mxu0 0.0
    %v1802 = vand.u32 %v1162, 4294901760
    %1803 = vmatmul.mubr.f32.gmra.mrb[0].mxu0 %v1802
    %v1804 = vpop.f32.mrb[0].mxu0
    %v1805 = vadd.f32 %v1718, %v1804
    %v1806 = vpop.f32.mrb[0].mxu0
    %1807 = vdwg.mxu0
    %1808 = vst.msk [vmem:[%s2] sm:$0xff] %vm66, %v1805
    // Predicated region
    $region14: #{dqn_forward.1} parent=1 // pred_check
      _
    $region15: #{dqn_forward.1} parent=1 // pred_check_branch
      %1810 = sbr.rel (0) target = $region17
    $region16: #{dqn_forward.1} parent=1 // pred_region
      _
    $region17: #{dqn_forward.1} parent=1 // pred_fallthru
      _
    // Predicated region
    $region18: #{dqn_forward.1} parent=1 // pred_check
      _
    $region19: #{dqn_forward.1} parent=1 // pred_check_branch
      %1812 = sbr.rel (0) target = $region21
    $region20: #{dqn_forward.1} parent=1 // pred_region
      _
    $region21: #{dqn_forward.1} parent=1 // pred_fallthru
      _
    %1813 = vsyncpa [#allocation3], 1

</llo_original>
